<compile_context>
chip_gen: v7x
topology: tpu7x:2x2x1
jax: 0.10.0
libtpu: 0.0.40
codegen_flags: <defaults>
</compile_context>

<pallas_src>
import functools

import jax
import jax.numpy as jnp
from jax.experimental import pallas as pl
from jax.experimental.pallas import tpu as pltpu

NZ = 128
H1 = 256
H2 = 512
OUT = 784  # 28 * 28


def _round_up(x, m):
    return (x + m - 1) // m * m


def _generator_kernel(x_ref, w1_ref, b1_ref, w2_ref, b2_ref, w3_ref, b3_ref, o_ref):
    # Layer 1: Linear(nz -> 256) + ReLU.  bf16 operands, f32 accumulation on MXU.
    h1 = jnp.dot(x_ref[...], w1_ref[...], preferred_element_type=jnp.float32)
    h1 = jnp.maximum(h1 + b1_ref[...], 0.0)

    # Layer 2: Linear(256 -> 512) + ReLU
    h2 = jnp.dot(h1.astype(jnp.bfloat16), w2_ref[...],
                 preferred_element_type=jnp.float32)
    h2 = jnp.maximum(h2 + b2_ref[...], 0.0)

    # Layer 3: Linear(512 -> 784) + Tanh (f32 tanh; cast only at the store so the
    # same kernel body is valid on v5e, which lacks bf16 EUP).
    h3 = jnp.dot(h2.astype(jnp.bfloat16), w3_ref[...],
                 preferred_element_type=jnp.float32)
    o_ref[...] = jnp.tanh(h3 + b3_ref[...]).astype(o_ref.dtype)


def prepare_params(w1, b1, w2, b2, w3, b3):
    """One-time preprocessing: bf16 weights for the MXU, (1, H) f32 biases.

    Hoisted out of the per-call path so the small cast/reshape XLA ops do not
    run before every kernel launch.
    """
    return (
        w1.astype(jnp.bfloat16), b1.reshape(1, H1).astype(jnp.float32),
        w2.astype(jnp.bfloat16), b2.reshape(1, H2).astype(jnp.float32),
        w3.astype(jnp.bfloat16), b3.reshape(1, OUT).astype(jnp.float32),
    )


@functools.partial(jax.jit, static_argnames=("block_b", "out_dtype"))
def generator_forward(x, w1b, b1, w2b, b2, w3b, b3, *, block_b=1024,
                      out_dtype=jnp.float32):
    """x: (B, nz) float32, prepared params -> (B, 1, 28, 28) out_dtype."""
    B, nz = x.shape
    assert nz == NZ

    # Batch tile: multiple of 16 (bf16 sublane tile), capped so the grid has at
    # least 2 steps whenever B allows two 16-row tiles (v7x megacore sharding).
    if B > 16:
        tile_cap = _round_up((B + 1) // 2, 16)
    else:
        tile_cap = 16
    block_b_eff = max(16, min(_round_up(block_b, 16), tile_cap))
    B_padded = _round_up(B, block_b_eff)
    grid = (B_padded // block_b_eff,)

    # Activation in bf16 (matmul operand); zero-pad batch to the tile multiple.
    x_bf16 = x.astype(jnp.bfloat16)
    if B_padded != B:
        x_bf16 = jnp.pad(x_bf16, ((0, B_padded - B), (0, 0)))

    # Grid-invariant tensors: single-buffered (their block never changes).
    const_mode = pl.Buffered(buffer_count=1)

    out_itemsize = jnp.dtype(out_dtype).itemsize
    cost = pl.CostEstimate(
        flops=2 * B_padded * (NZ * H1 + H1 * H2 + H2 * OUT),
        transcendentals=B_padded * OUT,
        bytes_accessed=(
            B_padded * NZ * 2                              # x (bf16)
            + (NZ * H1 + H1 * H2 + H2 * OUT) * 2           # weights (bf16, read once)
            + (H1 + H2 + OUT) * 4                          # biases (f32)
            + B_padded * OUT * out_itemsize                # output
        ),
    )

    out = pl.pallas_call(
        _generator_kernel,
        out_shape=jax.ShapeDtypeStruct((B_padded, OUT), out_dtype),
        grid_spec=pltpu.PrefetchScalarGridSpec(
            num_scalar_prefetch=0,
            grid=grid,
            in_specs=[
                # activations: tiled along batch (double-buffered by default)
                pl.BlockSpec((block_b_eff, NZ), lambda i: (i, 0)),
                # weights / biases: full arrays, same block every grid step
                pl.BlockSpec((NZ, H1), lambda i: (0, 0), pipeline_mode=const_mode),
                pl.BlockSpec((1, H1), lambda i: (0, 0), pipeline_mode=const_mode),
                pl.BlockSpec((H1, H2), lambda i: (0, 0), pipeline_mode=const_mode),
                pl.BlockSpec((1, H2), lambda i: (0, 0), pipeline_mode=const_mode),
                pl.BlockSpec((H2, OUT), lambda i: (0, 0), pipeline_mode=const_mode),
                pl.BlockSpec((1, OUT), lambda i: (0, 0), pipeline_mode=const_mode),
            ],
            out_specs=pl.BlockSpec((block_b_eff, OUT), lambda i: (i, 0)),
        ),
        compiler_params=pltpu.CompilerParams(
            dimension_semantics=("parallel",),
            vmem_limit_bytes=48 * 1024 * 1024,
        ),
        cost_estimate=cost,
    )(x_bf16, w1b, b1, w2b, b2, w3b, b3)

    # Drop batch padding only (output width is already the real 784).
    if B_padded != B:
        out = out[:B]
    return out.reshape(-1, 1, 28, 28)


def init_params(key):
    """Deterministic init mimicking nn.Linear default (uniform +/- 1/sqrt(fan_in))."""
    ks = jax.random.split(key, 6)

    def lin(kw, kb, fan_in, fan_out):
        bound = 1.0 / jnp.sqrt(fan_in)
        w = jax.random.uniform(kw, (fan_in, fan_out), jnp.float32, -bound, bound)
        b = jax.random.uniform(kb, (fan_out,), jnp.float32, -bound, bound)
        return w, b

    w1, b1 = lin(ks[0], ks[1], NZ, H1)
    w2, b2 = lin(ks[2], ks[3], H1, H2)
    w3, b3 = lin(ks[4], ks[5], H2, OUT)
    return w1, b1, w2, b2, w3, b3


def reference_forward(x, w1, b1, w2, b2, w3, b3):
    h1 = jnp.maximum(x @ w1 + b1, 0.0)
    h2 = jnp.maximum(h1 @ w2 + b2, 0.0)
    return jnp.tanh(h2 @ w3 + b3).reshape(-1, 1, 28, 28)


if __name__ == "__main__":
    key = jax.random.PRNGKey(0)
    k_params, k_x1, k_x2 = jax.random.split(key, 3)

    params = init_params(k_params)
    gparams = prepare_params(*params)   # one-time bf16 weight prep (hoisted)

    # Small test batch (nz = 128 fixed by the module): exercises grid=(1,) path.
    x1 = jax.random.normal(k_x1, (8, NZ), dtype=jnp.float32)
    out1 = jax.block_until_ready(generator_forward(x1, *gparams))
    assert out1.shape == (8, 1, 28, 28), out1.shape
    ref1 = reference_forward(x1, *params)
    assert jnp.allclose(out1, ref1, atol=5e-2, rtol=5e-2), (
        "mismatch vs JAX reference (B=8): max abs diff "
        f"{float(jnp.max(jnp.abs(out1 - ref1)))}"
    )

    # Second batch size exercises the multi-step grid + batch-padding path.
    x2 = jax.random.normal(k_x2, (40, NZ), dtype=jnp.float32)
    out2 = jax.block_until_ready(generator_forward(x2, *gparams))
    assert out2.shape == (40, 1, 28, 28), out2.shape
    ref2 = reference_forward(x2, *params)
    assert jnp.allclose(out2, ref2, atol=5e-2, rtol=5e-2), (
        "mismatch vs JAX reference (B=40): max abs diff "
        f"{float(jnp.max(jnp.abs(out2 - ref2)))}"
    )

    print("KERNEL_OK")
</pallas_src>

<mosaic_0001>
module attributes {stable_mosaic.version = 11 : i64} {
  func.func @_generator_kernel(%arg0: i32, %arg1: memref<16x128xbf16, #tpu.memory_space<vmem>>, %arg2: memref<128x256xbf16, #tpu.memory_space<vmem>>, %arg3: memref<1x256xf32, #tpu.memory_space<vmem>>, %arg4: memref<256x512xbf16, #tpu.memory_space<vmem>>, %arg5: memref<1x512xf32, #tpu.memory_space<vmem>>, %arg6: memref<512x784xbf16, #tpu.memory_space<vmem>>, %arg7: memref<1x784xf32, #tpu.memory_space<vmem>>, %arg8: memref<16x784xf32, #tpu.memory_space<vmem>>) attributes {dimension_semantics = [#tpu.dimension_semantics<parallel>], iteration_bounds = array<i64: 1>, scalar_prefetch = 0 : i64, scratch_operands = 0 : i64, tpu.core_type = #tpu.core_type<tc>, window_params = [{transform_indices = @transform_0, window_bounds = array<i64: 16, 128>}, {pipeline_mode = #tpu.pipeline_mode<synchronous>, transform_indices = @transform_1, window_bounds = array<i64: 128, 256>}, {pipeline_mode = #tpu.pipeline_mode<synchronous>, transform_indices = @transform_2, window_bounds = array<i64: 1, 256>}, {pipeline_mode = #tpu.pipeline_mode<synchronous>, transform_indices = @transform_3, window_bounds = array<i64: 256, 512>}, {pipeline_mode = #tpu.pipeline_mode<synchronous>, transform_indices = @transform_4, window_bounds = array<i64: 1, 512>}, {pipeline_mode = #tpu.pipeline_mode<synchronous>, transform_indices = @transform_5, window_bounds = array<i64: 512, 784>}, {pipeline_mode = #tpu.pipeline_mode<synchronous>, transform_indices = @transform_6, window_bounds = array<i64: 1, 784>}, {transform_indices = @transform_7, window_bounds = array<i64: 16, 784>}]} {
    %c0 = arith.constant 0 : index
    %c0_0 = arith.constant 0 : index
    %0 = vector.load %arg1[%c0, %c0_0] : memref<16x128xbf16, #tpu.memory_space<vmem>>, vector<16x128xbf16>
    %c0_1 = arith.constant 0 : index
    %c0_2 = arith.constant 0 : index
    %1 = vector.load %arg2[%c0_1, %c0_2] : memref<128x256xbf16, #tpu.memory_space<vmem>>, vector<128x256xbf16>
    %cst = arith.constant dense<0.000000e+00> : vector<16x256xf32>
    %2 = tpu.matmul %0, %1, %cst {dimension_numbers = #tpu.dot_dimension_numbers<[1], [0], [0], [1], [0, 0, 1, 1], [], []>} : vector<16x128xbf16>, vector<128x256xbf16>, vector<16x256xf32> -> vector<16x256xf32>
    %c0_3 = arith.constant 0 : index
    %c0_4 = arith.constant 0 : index
    %3 = vector.load %arg3[%c0_3, %c0_4] : memref<1x256xf32, #tpu.memory_space<vmem>>, vector<1x256xf32>
    %4 = vector.broadcast %3 : vector<1x256xf32> to vector<16x256xf32>
    %5 = arith.addf %2, %4 : vector<16x256xf32>
    %cst_5 = arith.constant 0.000000e+00 : f32
    %6 = vector.broadcast %cst_5 : f32 to vector<16x256xf32>
    %7 = arith.maximumf %5, %6 : vector<16x256xf32>
    %8 = arith.truncf %7 : vector<16x256xf32> to vector<16x256xbf16>
    %c0_6 = arith.constant 0 : index
    %c0_7 = arith.constant 0 : index
    %9 = vector.load %arg4[%c0_6, %c0_7] : memref<256x512xbf16, #tpu.memory_space<vmem>>, vector<256x512xbf16>
    %cst_8 = arith.constant dense<0.000000e+00> : vector<16x512xf32>
    %10 = tpu.matmul %8, %9, %cst_8 {dimension_numbers = #tpu.dot_dimension_numbers<[1], [0], [0], [1], [0, 0, 1, 1], [], []>} : vector<16x256xbf16>, vector<256x512xbf16>, vector<16x512xf32> -> vector<16x512xf32>
    %c0_9 = arith.constant 0 : index
    %c0_10 = arith.constant 0 : index
    %11 = vector.load %arg5[%c0_9, %c0_10] : memref<1x512xf32, #tpu.memory_space<vmem>>, vector<1x512xf32>
    %12 = vector.broadcast %11 : vector<1x512xf32> to vector<16x512xf32>
    %13 = arith.addf %10, %12 : vector<16x512xf32>
    %cst_11 = arith.constant 0.000000e+00 : f32
    %14 = vector.broadcast %cst_11 : f32 to vector<16x512xf32>
    %15 = arith.maximumf %13, %14 : vector<16x512xf32>
    %16 = arith.truncf %15 : vector<16x512xf32> to vector<16x512xbf16>
    %c0_12 = arith.constant 0 : index
    %c0_13 = arith.constant 0 : index
    %17 = vector.load %arg6[%c0_12, %c0_13] : memref<512x784xbf16, #tpu.memory_space<vmem>>, vector<512x784xbf16>
    %cst_14 = arith.constant dense<0.000000e+00> : vector<16x784xf32>
    %18 = tpu.matmul %16, %17, %cst_14 {dimension_numbers = #tpu.dot_dimension_numbers<[1], [0], [0], [1], [0, 0, 1, 1], [], []>} : vector<16x512xbf16>, vector<512x784xbf16>, vector<16x784xf32> -> vector<16x784xf32>
    %c0_15 = arith.constant 0 : index
    %c0_16 = arith.constant 0 : index
    %19 = vector.load %arg7[%c0_15, %c0_16] : memref<1x784xf32, #tpu.memory_space<vmem>>, vector<1x784xf32>
    %20 = vector.broadcast %19 : vector<1x784xf32> to vector<16x784xf32>
    %21 = arith.addf %18, %20 : vector<16x784xf32>
    %22 = math.tanh %21 : vector<16x784xf32>
    %c0_17 = arith.constant 0 : index
    %c0_18 = arith.constant 0 : index
    %23 = vector.load %arg8[%c0_17, %c0_18] : memref<16x784xf32, #tpu.memory_space<vmem>>, vector<16x784xf32>
    tpu.vector_store %arg8[%c0_17, %c0_18], %22 {strides = array<i32>} : memref<16x784xf32, #tpu.memory_space<vmem>>, vector<16x784xf32>,
    return
  }
  func.func @transform_0(%arg0: i32) -> (i32, i32) {
    %c0_i32 = arith.constant 0 : i32
    %c0_i32_0 = arith.constant 0 : i32
    return %arg0, %c0_i32 : i32, i32
  }
  func.func @transform_1(%arg0: i32) -> (i32, i32) {
    %c0_i32 = arith.constant 0 : i32
    %c0_i32_0 = arith.constant 0 : i32
    %c0_i32_1 = arith.constant 0 : i32
    return %c0_i32, %c0_i32_0 : i32, i32
  }
  func.func @transform_2(%arg0: i32) -> (i32, i32) {
    %c0_i32 = arith.constant 0 : i32
    %c0_i32_0 = arith.constant 0 : i32
    %c0_i32_1 = arith.constant 0 : i32
    return %c0_i32, %c0_i32_0 : i32, i32
  }
  func.func @transform_3(%arg0: i32) -> (i32, i32) {
    %c0_i32 = arith.constant 0 : i32
    %c0_i32_0 = arith.constant 0 : i32
    %c0_i32_1 = arith.constant 0 : i32
    return %c0_i32, %c0_i32_0 : i32, i32
  }
  func.func @transform_4(%arg0: i32) -> (i32, i32) {
    %c0_i32 = arith.constant 0 : i32
    %c0_i32_0 = arith.constant 0 : i32
    %c0_i32_1 = arith.constant 0 : i32
    return %c0_i32, %c0_i32_0 : i32, i32
  }
  func.func @transform_5(%arg0: i32) -> (i32, i32) {
    %c0_i32 = arith.constant 0 : i32
    %c0_i32_0 = arith.constant 0 : i32
    %c0_i32_1 = arith.constant 0 : i32
    return %c0_i32, %c0_i32_0 : i32, i32
  }
  func.func @transform_6(%arg0: i32) -> (i32, i32) {
    %c0_i32 = arith.constant 0 : i32
    %c0_i32_0 = arith.constant 0 : i32
    %c0_i32_1 = arith.constant 0 : i32
    return %c0_i32, %c0_i32_0 : i32, i32
  }
  func.func @transform_7(%arg0: i32) -> (i32, i32) {
    %c0_i32 = arith.constant 0 : i32
    %c0_i32_0 = arith.constant 0 : i32
    return %arg0, %c0_i32 : i32, i32
  }
}

</mosaic_0001>

<llo_original>
// kernel: generator_forward.1
$region0: #{generator_forward.1}
  #allocation0 [shape = 'u32[]', space=smem, size = 0x4, offset = 0x4, fixed_abs, tag = 'smem constant byte address 0x4 - core index']
  #allocation1 [shape = 'u32[144,128]{1,0:T(1,128)}', space=vmem, size = 0x12000, scoped, tag = 'internal scratch']
  %s0 = inlined_call_operand.vmem [shape: bf16[16,128], index: 0, kind: input, shape index: {}]
  %s1 = inlined_call_operand.vmem [shape: bf16[128,256], index: 1, kind: input, shape index: {}]
  %s2 = inlined_call_operand.vmem [shape: f32[1,256], index: 2, kind: input, shape index: {}]
  %s3 = inlined_call_operand.vmem [shape: bf16[256,512], index: 3, kind: input, shape index: {}]
  %s4 = inlined_call_operand.vmem [shape: f32[1,512], index: 4, kind: input, shape index: {}]
  %s5 = inlined_call_operand.vmem [shape: bf16[512,784], index: 5, kind: input, shape index: {}]
  %s6 = inlined_call_operand.vmem [shape: f32[1,784], index: 6, kind: input, shape index: {}]
  %s7 = inlined_call_operand.vmem [shape: f32[16,784], index: 7, kind: output, shape index: {}]
  %s8 = sld [smem:[#allocation0]]
  $region38: #{generator_forward.1} parent=0
    _
  %s10 = ssub.s32 1, %s8
  %s11 = scalar_select 0, %s10, %s8
  // Predicated region
  $region2: #{generator_forward.1} parent=0 // pred_check
    _
  $region3: #{generator_forward.1} parent=0 // pred_check_branch
    %13 = sbr.rel (0) target = $region5
  $region4: #{generator_forward.1} parent=0 // pred_region
    _
  $region5: #{generator_forward.1} parent=0 // pred_fallthru
    _
  // Predicated region
  $region6: #{generator_forward.1} parent=0 // pred_check
    _
  $region7: #{generator_forward.1} parent=0 // pred_check_branch
    %15 = sbr.rel (0) target = $region9
  $region8: #{generator_forward.1} parent=0 // pred_region
    _
  $region9: #{generator_forward.1} parent=0 // pred_fallthru
    _
  // Predicated region
  $region10: #{generator_forward.1} parent=0 // pred_check
    _
  $region11: #{generator_forward.1} parent=0 // pred_check_branch
    %17 = sbr.rel (0) target = $region13
  $region12: #{generator_forward.1} parent=0 // pred_region
    _
  $region13: #{generator_forward.1} parent=0 // pred_fallthru
    _
  // Predicated region
  $region14: #{generator_forward.1} parent=0 // pred_check
    _
  $region15: #{generator_forward.1} parent=0 // pred_check_branch
    %19 = sbr.rel (0) target = $region17
  $region16: #{generator_forward.1} parent=0 // pred_region
    _
  $region17: #{generator_forward.1} parent=0 // pred_fallthru
    _
  // Predicated region
  $region18: #{generator_forward.1} parent=0 // pred_check
    _
  $region19: #{generator_forward.1} parent=0 // pred_check_branch
    %21 = sbr.rel (0) target = $region21
  $region20: #{generator_forward.1} parent=0 // pred_region
    _
  $region21: #{generator_forward.1} parent=0 // pred_fallthru
    _
  // Predicated region
  $region22: #{generator_forward.1} parent=0 // pred_check
    _
  $region23: #{generator_forward.1} parent=0 // pred_check_branch
    %23 = sbr.rel (0) target = $region25
  $region24: #{generator_forward.1} parent=0 // pred_region
    _
  $region25: #{generator_forward.1} parent=0 // pred_fallthru
    _
  // Predicated region
  $region26: #{generator_forward.1} parent=0 // pred_check
    _
  $region27: #{generator_forward.1} parent=0 // pred_check_branch
    %25 = sbr.rel (0) target = $region29
  $region28: #{generator_forward.1} parent=0 // pred_region
    _
  $region29: #{generator_forward.1} parent=0 // pred_fallthru
    _
  %v27 = vld [vmem:[%s0] sm:$0xf]
  %v28 = vld [vmem:[%s0 + $0x4] sm:$0xf]
  %v29 = vld [vmem:[%s1] sm:$0xff]
  %v30 = vld [vmem:[%s1 + $0x8] sm:$0xff]
  %v31 = vld [vmem:[%s1 + $0x10] sm:$0xff]
  %v32 = vld [vmem:[%s1 + $0x18] sm:$0xff]
  %v33 = vld [vmem:[%s1 + $0x20] sm:$0xff]
  %v34 = vld [vmem:[%s1 + $0x28] sm:$0xff]
  %v35 = vld [vmem:[%s1 + $0x30] sm:$0xff]
  %v36 = vld [vmem:[%s1 + $0x38] sm:$0xff]
  %v37 = vld [vmem:[%s1 + $0x40] sm:$0xff]
  %v38 = vld [vmem:[%s1 + $0x48] sm:$0xff]
  %v39 = vld [vmem:[%s1 + $0x50] sm:$0xff]
  %v40 = vld [vmem:[%s1 + $0x58] sm:$0xff]
  %v41 = vld [vmem:[%s1 + $0x60] sm:$0xff]
  %v42 = vld [vmem:[%s1 + $0x68] sm:$0xff]
  %v43 = vld [vmem:[%s1 + $0x70] sm:$0xff]
  %v44 = vld [vmem:[%s1 + $0x78] sm:$0xff]
  %v45 = vld [vmem:[%s2] sm:$0x3]
  %v47 = vlaneseq
  %v48 = vshrl.u32 %v47, 7
  %v49 = vsub.s32 0, %v48
  %v50 = vrot.slane %v45, %v49
  %v51 = vlaneseq
  %v52 = vshrl.u32 %v51, 7
  %v53 = vsub.s32 1, %v52
  %v54 = vrot.slane %v45, %v53
  %v59 = vunpack.c.l.b16 %v27
  %v60 = vunpack.c.l.b16 %v28
  %v61 = vpack.c.b16 %v60, %v59
  %v79 = vunpack.c.l.b16 %v29
  %v80 = vunpack.c.h.b16 %v29
  %v81 = vunpack.c.l.b16 %v30
  %v82 = vunpack.c.h.b16 %v30
  %v83 = vunpack.c.l.b16 %v31
  %v84 = vunpack.c.h.b16 %v31
  %v85 = vunpack.c.l.b16 %v32
  %v86 = vunpack.c.h.b16 %v32
  %v87 = vunpack.c.l.b16 %v33
  %v88 = vunpack.c.h.b16 %v33
  %v89 = vunpack.c.l.b16 %v34
  %v90 = vunpack.c.h.b16 %v34
  %v91 = vunpack.c.l.b16 %v35
  %v92 = vunpack.c.h.b16 %v35
  %v93 = vunpack.c.l.b16 %v36
  %v94 = vunpack.c.h.b16 %v36
  %v95 = vunpack.c.l.b16 %v37
  %v96 = vunpack.c.h.b16 %v37
  %v97 = vunpack.c.l.b16 %v38
  %v98 = vunpack.c.h.b16 %v38
  %v99 = vunpack.c.l.b16 %v39
  %v100 = vunpack.c.h.b16 %v39
  %v101 = vunpack.c.l.b16 %v40
  %v102 = vunpack.c.h.b16 %v40
  %v103 = vunpack.c.l.b16 %v41
  %v104 = vunpack.c.h.b16 %v41
  %v105 = vunpack.c.l.b16 %v42
  %v106 = vunpack.c.h.b16 %v42
  %v107 = vunpack.c.l.b16 %v43
  %v108 = vunpack.c.h.b16 %v43
  %v109 = vunpack.c.l.b16 %v44
  %v110 = vunpack.c.h.b16 %v44
  %v111 = vpack.c.b16 %v81, %v79
  %v112 = vpack.c.b16 %v82, %v80
  %v113 = vpack.c.b16 %v85, %v83
  %v114 = vpack.c.b16 %v86, %v84
  %v115 = vpack.c.b16 %v89, %v87
  %v116 = vpack.c.b16 %v90, %v88
  %v117 = vpack.c.b16 %v93, %v91
  %v118 = vpack.c.b16 %v94, %v92
  %v119 = vpack.c.b16 %v97, %v95
  %v120 = vpack.c.b16 %v98, %v96
  %v121 = vpack.c.b16 %v101, %v99
  %v122 = vpack.c.b16 %v102, %v100
  %v123 = vpack.c.b16 %v105, %v103
  %v124 = vpack.c.b16 %v106, %v104
  %v125 = vpack.c.b16 %v109, %v107
  %v126 = vpack.c.b16 %v110, %v108
  %143 = vmatprep.subr.bf16.mxu0 %v112
  %144 = vmatpush1.bf16.msra.mxu0 %v111
  %145 = vmatprep.subr.bf16.mxu0 %v114
  %146 = vmatpush1.bf16.msra.mxu0 %v113
  %147 = vmatprep.subr.bf16.mxu0 %v116
  %148 = vmatpush1.bf16.msra.mxu0 %v115
  %149 = vmatprep.subr.bf16.mxu0 %v118
  %150 = vmatpush1.bf16.msra.mxu0 %v117
  %151 = vmatprep.subr.bf16.mxu0 %v120
  %152 = vmatpush1.bf16.msra.mxu0 %v119
  %153 = vmatprep.subr.bf16.mxu0 %v122
  %154 = vmatpush1.bf16.msra.mxu0 %v121
  %155 = vmatprep.subr.bf16.mxu0 %v124
  %156 = vmatpush1.bf16.msra.mxu0 %v123
  %157 = vmatprep.subr.bf16.mxu0 %v126
  %158 = vmatpush1.bf16.msra.mxu0 %v125
  %159 = vmatprep.subr.bf16.mxu0 0
  %160 = vmatpush1.bf16.msra.mxu0 0
  %161 = vmatprep.subr.bf16.mxu0 0
  %162 = vmatpush1.bf16.msra.mxu0 0
  %163 = vmatprep.subr.bf16.mxu0 0
  %164 = vmatpush1.bf16.msra.mxu0 0
  %165 = vmatprep.subr.bf16.mxu0 0
  %166 = vmatpush1.bf16.msra.mxu0 0
  %167 = vmatprep.subr.bf16.mxu0 0
  %168 = vmatpush1.bf16.msra.mxu0 0
  %169 = vmatprep.subr.bf16.mxu0 0
  %170 = vmatpush1.bf16.msra.mxu0 0
  %171 = vmatprep.subr.bf16.mxu0 0
  %172 = vmatpush1.bf16.msra.mxu0 0
  %173 = vmatprep.subr.bf16.mxu0 0
  %174 = vmatpush1.bf16.msra.mxu0 0
  %175 = vmatprep.mubr.bf16.mxu0 0
  %176 = vmatmul.mubr.bf16.gmra.mrb[0].mxu0 %v61
  %v177 = vpop.f32.mrb[0].mxu0
  %v178 = vadd.f32 %v50, %v177
  %v179 = vpop.f32.mrb[0].mxu0
  %v180 = vadd.f32 %v54, %v179
  %v181 = vpop.f32.mrb[0].mxu0
  %v182 = vadd.f32 %v50, %v181
  %v183 = vpop.f32.mrb[0].mxu0
  %v184 = vadd.f32 %v54, %v183
  %185 = vdwg.mxu0
  %v186 = vmax.f32 %v178, 0.0
  %v187 = vmax.f32 %v180, 0.0
  %v188 = vmax.f32 %v182, 0.0
  %v189 = vmax.f32 %v184, 0.0
  %v190 = vpack.c.bf16 %v188, %v186
  %v191 = vpack.c.bf16 %v189, %v187
  %v192 = vld [vmem:[%s3] sm:$0xff]
  %v193 = vld [vmem:[%s3 + $0x8] sm:$0xff]
  %v194 = vld [vmem:[%s3 + $0x10] sm:$0xff]
  %v195 = vld [vmem:[%s3 + $0x18] sm:$0xff]
  %v196 = vld [vmem:[%s3 + $0x20] sm:$0xff]
  %v197 = vld [vmem:[%s3 + $0x28] sm:$0xff]
  %v198 = vld [vmem:[%s3 + $0x30] sm:$0xff]
  %v199 = vld [vmem:[%s3 + $0x38] sm:$0xff]
  %v200 = vld [vmem:[%s3 + $0x40] sm:$0xff]
  %v201 = vld [vmem:[%s3 + $0x48] sm:$0xff]
  %v202 = vld [vmem:[%s3 + $0x50] sm:$0xff]
  %v203 = vld [vmem:[%s3 + $0x58] sm:$0xff]
  %v204 = vld [vmem:[%s3 + $0x60] sm:$0xff]
  %v205 = vld [vmem:[%s3 + $0x68] sm:$0xff]
  %v206 = vld [vmem:[%s3 + $0x70] sm:$0xff]
  %v207 = vld [vmem:[%s3 + $0x78] sm:$0xff]
  %v208 = vld [vmem:[%s3 + $0x80] sm:$0xff]
  %v209 = vld [vmem:[%s3 + $0x88] sm:$0xff]
  %v210 = vld [vmem:[%s3 + $0x90] sm:$0xff]
  %v211 = vld [vmem:[%s3 + $0x98] sm:$0xff]
  %v212 = vld [vmem:[%s3 + $0xa0] sm:$0xff]
  %v213 = vld [vmem:[%s3 + $0xa8] sm:$0xff]
  %v214 = vld [vmem:[%s3 + $0xb0] sm:$0xff]
  %v215 = vld [vmem:[%s3 + $0xb8] sm:$0xff]
  %v216 = vld [vmem:[%s3 + $0xc0] sm:$0xff]
  %v217 = vld [vmem:[%s3 + $0xc8] sm:$0xff]
  %v218 = vld [vmem:[%s3 + $0xd0] sm:$0xff]
  %v219 = vld [vmem:[%s3 + $0xd8] sm:$0xff]
  %v220 = vld [vmem:[%s3 + $0xe0] sm:$0xff]
  %v221 = vld [vmem:[%s3 + $0xe8] sm:$0xff]
  %v222 = vld [vmem:[%s3 + $0xf0] sm:$0xff]
  %v223 = vld [vmem:[%s3 + $0xf8] sm:$0xff]
  %v224 = vld [vmem:[%s3 + $0x100] sm:$0xff]
  %v225 = vld [vmem:[%s3 + $0x108] sm:$0xff]
  %v226 = vld [vmem:[%s3 + $0x110] sm:$0xff]
  %v227 = vld [vmem:[%s3 + $0x118] sm:$0xff]
  %v228 = vld [vmem:[%s3 + $0x120] sm:$0xff]
  %v229 = vld [vmem:[%s3 + $0x128] sm:$0xff]
  %v230 = vld [vmem:[%s3 + $0x130] sm:$0xff]
  %v231 = vld [vmem:[%s3 + $0x138] sm:$0xff]
  %v232 = vld [vmem:[%s3 + $0x140] sm:$0xff]
  %v233 = vld [vmem:[%s3 + $0x148] sm:$0xff]
  %v234 = vld [vmem:[%s3 + $0x150] sm:$0xff]
  %v235 = vld [vmem:[%s3 + $0x158] sm:$0xff]
  %v236 = vld [vmem:[%s3 + $0x160] sm:$0xff]
  %v237 = vld [vmem:[%s3 + $0x168] sm:$0xff]
  %v238 = vld [vmem:[%s3 + $0x170] sm:$0xff]
  %v239 = vld [vmem:[%s3 + $0x178] sm:$0xff]
  %v240 = vld [vmem:[%s3 + $0x180] sm:$0xff]
  %v241 = vld [vmem:[%s3 + $0x188] sm:$0xff]
  %v242 = vld [vmem:[%s3 + $0x190] sm:$0xff]
  %v243 = vld [vmem:[%s3 + $0x198] sm:$0xff]
  %v244 = vld [vmem:[%s3 + $0x1a0] sm:$0xff]
  %v245 = vld [vmem:[%s3 + $0x1a8] sm:$0xff]
  %v246 = vld [vmem:[%s3 + $0x1b0] sm:$0xff]
  %v247 = vld [vmem:[%s3 + $0x1b8] sm:$0xff]
  %v248 = vld [vmem:[%s3 + $0x1c0] sm:$0xff]
  %v249 = vld [vmem:[%s3 + $0x1c8] sm:$0xff]
  %v250 = vld [vmem:[%s3 + $0x1d0] sm:$0xff]
  %v251 = vld [vmem:[%s3 + $0x1d8] sm:$0xff]
  %v252 = vld [vmem:[%s3 + $0x1e0] sm:$0xff]
  %v253 = vld [vmem:[%s3 + $0x1e8] sm:$0xff]
  %v254 = vld [vmem:[%s3 + $0x1f0] sm:$0xff]
  %v255 = vld [vmem:[%s3 + $0x1f8] sm:$0xff]
  %v256 = vld [vmem:[%s4] sm:$0xf]
  %v258 = vlaneseq
  %v259 = vshrl.u32 %v258, 7
  %v260 = vsub.s32 0, %v259
  %v261 = vrot.slane %v256, %v260
  %v262 = vlaneseq
  %v263 = vshrl.u32 %v262, 7
  %v264 = vsub.s32 1, %v263
  %v265 = vrot.slane %v256, %v264
  %v266 = vlaneseq
  %v267 = vshrl.u32 %v266, 7
  %v268 = vsub.s32 2, %v267
  %v269 = vrot.slane %v256, %v268
  %v270 = vlaneseq
  %v271 = vshrl.u32 %v270, 7
  %v272 = vsub.s32 3, %v271
  %v273 = vrot.slane %v256, %v272
  %v342 = vunpack.c.l.b16 %v192
  %v343 = vunpack.c.h.b16 %v192
  %v344 = vunpack.c.l.b16 %v193
  %v345 = vunpack.c.h.b16 %v193
  %v346 = vunpack.c.l.b16 %v194
  %v347 = vunpack.c.h.b16 %v194
  %v348 = vunpack.c.l.b16 %v195
  %v349 = vunpack.c.h.b16 %v195
  %v350 = vunpack.c.l.b16 %v196
  %v351 = vunpack.c.h.b16 %v196
  %v352 = vunpack.c.l.b16 %v197
  %v353 = vunpack.c.h.b16 %v197
  %v354 = vunpack.c.l.b16 %v198
  %v355 = vunpack.c.h.b16 %v198
  %v356 = vunpack.c.l.b16 %v199
  %v357 = vunpack.c.h.b16 %v199
  %v358 = vunpack.c.l.b16 %v200
  %v359 = vunpack.c.h.b16 %v200
  %v360 = vunpack.c.l.b16 %v201
  %v361 = vunpack.c.h.b16 %v201
  %v362 = vunpack.c.l.b16 %v202
  %v363 = vunpack.c.h.b16 %v202
  %v364 = vunpack.c.l.b16 %v203
  %v365 = vunpack.c.h.b16 %v203
  %v366 = vunpack.c.l.b16 %v204
  %v367 = vunpack.c.h.b16 %v204
  %v368 = vunpack.c.l.b16 %v205
  %v369 = vunpack.c.h.b16 %v205
  %v370 = vunpack.c.l.b16 %v206
  %v371 = vunpack.c.h.b16 %v206
  %v372 = vunpack.c.l.b16 %v207
  %v373 = vunpack.c.h.b16 %v207
  %v374 = vunpack.c.l.b16 %v208
  %v375 = vunpack.c.h.b16 %v208
  %v376 = vunpack.c.l.b16 %v209
  %v377 = vunpack.c.h.b16 %v209
  %v378 = vunpack.c.l.b16 %v210
  %v379 = vunpack.c.h.b16 %v210
  %v380 = vunpack.c.l.b16 %v211
  %v381 = vunpack.c.h.b16 %v211
  %v382 = vunpack.c.l.b16 %v212
  %v383 = vunpack.c.h.b16 %v212
  %v384 = vunpack.c.l.b16 %v213
  %v385 = vunpack.c.h.b16 %v213
  %v386 = vunpack.c.l.b16 %v214
  %v387 = vunpack.c.h.b16 %v214
  %v388 = vunpack.c.l.b16 %v215
  %v389 = vunpack.c.h.b16 %v215
  %v390 = vunpack.c.l.b16 %v216
  %v391 = vunpack.c.h.b16 %v216
  %v392 = vunpack.c.l.b16 %v217
  %v393 = vunpack.c.h.b16 %v217
  %v394 = vunpack.c.l.b16 %v218
  %v395 = vunpack.c.h.b16 %v218
  %v396 = vunpack.c.l.b16 %v219
  %v397 = vunpack.c.h.b16 %v219
  %v398 = vunpack.c.l.b16 %v220
  %v399 = vunpack.c.h.b16 %v220
  %v400 = vunpack.c.l.b16 %v221
  %v401 = vunpack.c.h.b16 %v221
  %v402 = vunpack.c.l.b16 %v222
  %v403 = vunpack.c.h.b16 %v222
  %v404 = vunpack.c.l.b16 %v223
  %v405 = vunpack.c.h.b16 %v223
  %v406 = vunpack.c.l.b16 %v224
  %v407 = vunpack.c.h.b16 %v224
  %v408 = vunpack.c.l.b16 %v225
  %v409 = vunpack.c.h.b16 %v225
  %v410 = vunpack.c.l.b16 %v226
  %v411 = vunpack.c.h.b16 %v226
  %v412 = vunpack.c.l.b16 %v227
  %v413 = vunpack.c.h.b16 %v227
  %v414 = vunpack.c.l.b16 %v228
  %v415 = vunpack.c.h.b16 %v228
  %v416 = vunpack.c.l.b16 %v229
  %v417 = vunpack.c.h.b16 %v229
  %v418 = vunpack.c.l.b16 %v230
  %v419 = vunpack.c.h.b16 %v230
  %v420 = vunpack.c.l.b16 %v231
  %v421 = vunpack.c.h.b16 %v231
  %v422 = vunpack.c.l.b16 %v232
  %v423 = vunpack.c.h.b16 %v232
  %v424 = vunpack.c.l.b16 %v233
  %v425 = vunpack.c.h.b16 %v233
  %v426 = vunpack.c.l.b16 %v234
  %v427 = vunpack.c.h.b16 %v234
  %v428 = vunpack.c.l.b16 %v235
  %v429 = vunpack.c.h.b16 %v235
  %v430 = vunpack.c.l.b16 %v236
  %v431 = vunpack.c.h.b16 %v236
  %v432 = vunpack.c.l.b16 %v237
  %v433 = vunpack.c.h.b16 %v237
  %v434 = vunpack.c.l.b16 %v238
  %v435 = vunpack.c.h.b16 %v238
  %v436 = vunpack.c.l.b16 %v239
  %v437 = vunpack.c.h.b16 %v239
  %v438 = vunpack.c.l.b16 %v240
  %v439 = vunpack.c.h.b16 %v240
  %v440 = vunpack.c.l.b16 %v241
  %v441 = vunpack.c.h.b16 %v241
  %v442 = vunpack.c.l.b16 %v242
  %v443 = vunpack.c.h.b16 %v242
  %v444 = vunpack.c.l.b16 %v243
  %v445 = vunpack.c.h.b16 %v243
  %v446 = vunpack.c.l.b16 %v244
  %v447 = vunpack.c.h.b16 %v244
  %v448 = vunpack.c.l.b16 %v245
  %v449 = vunpack.c.h.b16 %v245
  %v450 = vunpack.c.l.b16 %v246
  %v451 = vunpack.c.h.b16 %v246
  %v452 = vunpack.c.l.b16 %v247
  %v453 = vunpack.c.h.b16 %v247
  %v454 = vunpack.c.l.b16 %v248
  %v455 = vunpack.c.h.b16 %v248
  %v456 = vunpack.c.l.b16 %v249
  %v457 = vunpack.c.h.b16 %v249
  %v458 = vunpack.c.l.b16 %v250
  %v459 = vunpack.c.h.b16 %v250
  %v460 = vunpack.c.l.b16 %v251
  %v461 = vunpack.c.h.b16 %v251
  %v462 = vunpack.c.l.b16 %v252
  %v463 = vunpack.c.h.b16 %v252
  %v464 = vunpack.c.l.b16 %v253
  %v465 = vunpack.c.h.b16 %v253
  %v466 = vunpack.c.l.b16 %v254
  %v467 = vunpack.c.h.b16 %v254
  %v468 = vunpack.c.l.b16 %v255
  %v469 = vunpack.c.h.b16 %v255
  %v470 = vpack.c.b16 %v346, %v342
  %v471 = vpack.c.b16 %v347, %v343
  %v472 = vpack.c.b16 %v348, %v344
  %v473 = vpack.c.b16 %v349, %v345
  %v474 = vpack.c.b16 %v354, %v350
  %v475 = vpack.c.b16 %v355, %v351
  %v476 = vpack.c.b16 %v356, %v352
  %v477 = vpack.c.b16 %v357, %v353
  %v478 = vpack.c.b16 %v362, %v358
  %v479 = vpack.c.b16 %v363, %v359
  %v480 = vpack.c.b16 %v364, %v360
  %v481 = vpack.c.b16 %v365, %v361
  %v482 = vpack.c.b16 %v370, %v366
  %v483 = vpack.c.b16 %v371, %v367
  %v484 = vpack.c.b16 %v372, %v368
  %v485 = vpack.c.b16 %v373, %v369
  %v486 = vpack.c.b16 %v378, %v374
  %v487 = vpack.c.b16 %v379, %v375
  %v488 = vpack.c.b16 %v380, %v376
  %v489 = vpack.c.b16 %v381, %v377
  %v490 = vpack.c.b16 %v386, %v382
  %v491 = vpack.c.b16 %v387, %v383
  %v492 = vpack.c.b16 %v388, %v384
  %v493 = vpack.c.b16 %v389, %v385
  %v494 = vpack.c.b16 %v394, %v390
  %v495 = vpack.c.b16 %v395, %v391
  %v496 = vpack.c.b16 %v396, %v392
  %v497 = vpack.c.b16 %v397, %v393
  %v498 = vpack.c.b16 %v402, %v398
  %v499 = vpack.c.b16 %v403, %v399
  %v500 = vpack.c.b16 %v404, %v400
  %v501 = vpack.c.b16 %v405, %v401
  %v502 = vpack.c.b16 %v410, %v406
  %v503 = vpack.c.b16 %v411, %v407
  %v504 = vpack.c.b16 %v412, %v408
  %v505 = vpack.c.b16 %v413, %v409
  %v506 = vpack.c.b16 %v418, %v414
  %v507 = vpack.c.b16 %v419, %v415
  %v508 = vpack.c.b16 %v420, %v416
  %v509 = vpack.c.b16 %v421, %v417
  %v510 = vpack.c.b16 %v426, %v422
  %v511 = vpack.c.b16 %v427, %v423
  %v512 = vpack.c.b16 %v428, %v424
  %v513 = vpack.c.b16 %v429, %v425
  %v514 = vpack.c.b16 %v434, %v430
  %v515 = vpack.c.b16 %v435, %v431
  %v516 = vpack.c.b16 %v436, %v432
  %v517 = vpack.c.b16 %v437, %v433
  %v518 = vpack.c.b16 %v442, %v438
  %v519 = vpack.c.b16 %v443, %v439
  %v520 = vpack.c.b16 %v444, %v440
  %v521 = vpack.c.b16 %v445, %v441
  %v522 = vpack.c.b16 %v450, %v446
  %v523 = vpack.c.b16 %v451, %v447
  %v524 = vpack.c.b16 %v452, %v448
  %v525 = vpack.c.b16 %v453, %v449
  %v526 = vpack.c.b16 %v458, %v454
  %v527 = vpack.c.b16 %v459, %v455
  %v528 = vpack.c.b16 %v460, %v456
  %v529 = vpack.c.b16 %v461, %v457
  %v530 = vpack.c.b16 %v466, %v462
  %v531 = vpack.c.b16 %v467, %v463
  %v532 = vpack.c.b16 %v468, %v464
  %v533 = vpack.c.b16 %v469, %v465
  %598 = vmatprep.subr.bf16.mxu0 %v471
  %599 = vmatpush1.bf16.msra.mxu0 %v470
  %600 = vmatprep.subr.bf16.mxu0 %v475
  %601 = vmatpush1.bf16.msra.mxu0 %v474
  %602 = vmatprep.subr.bf16.mxu0 %v479
  %603 = vmatpush1.bf16.msra.mxu0 %v478
  %604 = vmatprep.subr.bf16.mxu0 %v483
  %605 = vmatpush1.bf16.msra.mxu0 %v482
  %606 = vmatprep.subr.bf16.mxu0 %v487
  %607 = vmatpush1.bf16.msra.mxu0 %v486
  %608 = vmatprep.subr.bf16.mxu0 %v491
  %609 = vmatpush1.bf16.msra.mxu0 %v490
  %610 = vmatprep.subr.bf16.mxu0 %v495
  %611 = vmatpush1.bf16.msra.mxu0 %v494
  %612 = vmatprep.subr.bf16.mxu0 %v499
  %613 = vmatpush1.bf16.msra.mxu0 %v498
  %614 = vmatprep.subr.bf16.mxu0 %v503
  %615 = vmatpush1.bf16.msra.mxu0 %v502
  %616 = vmatprep.subr.bf16.mxu0 %v507
  %617 = vmatpush1.bf16.msra.mxu0 %v506
  %618 = vmatprep.subr.bf16.mxu0 %v511
  %619 = vmatpush1.bf16.msra.mxu0 %v510
  %620 = vmatprep.subr.bf16.mxu0 %v515
  %621 = vmatpush1.bf16.msra.mxu0 %v514
  %622 = vmatprep.subr.bf16.mxu0 %v519
  %623 = vmatpush1.bf16.msra.mxu0 %v518
  %624 = vmatprep.subr.bf16.mxu0 %v523
  %625 = vmatpush1.bf16.msra.mxu0 %v522
  %626 = vmatprep.subr.bf16.mxu0 %v527
  %627 = vmatpush1.bf16.msra.mxu0 %v526
  %628 = vmatprep.subr.bf16.mxu0 %v531
  %629 = vmatpush1.bf16.msra.mxu0 %v530
  %630 = vmatprep.mubr.bf16.mxu0 %v191
  %631 = vmatmul.mubr.bf16.gmra.mrb[0].mxu0 %v190
  %v632 = vpop.f32.mrb[0].mxu0
  %v633 = vadd.f32 %v261, %v632
  %v634 = vpop.f32.mrb[0].mxu0
  %v635 = vadd.f32 %v265, %v634
  %v636 = vpop.f32.mrb[0].mxu0
  %v637 = vadd.f32 %v261, %v636
  %v638 = vpop.f32.mrb[0].mxu0
  %v639 = vadd.f32 %v265, %v638
  %640 = vdwg.mxu0
  %641 = vmatprep.subr.bf16.mxu0 %v473
  %642 = vmatpush1.bf16.msra.mxu0 %v472
  %643 = vmatprep.subr.bf16.mxu0 %v477
  %644 = vmatpush1.bf16.msra.mxu0 %v476
  %645 = vmatprep.subr.bf16.mxu0 %v481
  %646 = vmatpush1.bf16.msra.mxu0 %v480
  %647 = vmatprep.subr.bf16.mxu0 %v485
  %648 = vmatpush1.bf16.msra.mxu0 %v484
  %649 = vmatprep.subr.bf16.mxu0 %v489
  %650 = vmatpush1.bf16.msra.mxu0 %v488
  %651 = vmatprep.subr.bf16.mxu0 %v493
  %652 = vmatpush1.bf16.msra.mxu0 %v492
  %653 = vmatprep.subr.bf16.mxu0 %v497
  %654 = vmatpush1.bf16.msra.mxu0 %v496
  %655 = vmatprep.subr.bf16.mxu0 %v501
  %656 = vmatpush1.bf16.msra.mxu0 %v500
  %657 = vmatprep.subr.bf16.mxu0 %v505
  %658 = vmatpush1.bf16.msra.mxu0 %v504
  %659 = vmatprep.subr.bf16.mxu0 %v509
  %660 = vmatpush1.bf16.msra.mxu0 %v508
  %661 = vmatprep.subr.bf16.mxu0 %v513
  %662 = vmatpush1.bf16.msra.mxu0 %v512
  %663 = vmatprep.subr.bf16.mxu0 %v517
  %664 = vmatpush1.bf16.msra.mxu0 %v516
  %665 = vmatprep.subr.bf16.mxu0 %v521
  %666 = vmatpush1.bf16.msra.mxu0 %v520
  %667 = vmatprep.subr.bf16.mxu0 %v525
  %668 = vmatpush1.bf16.msra.mxu0 %v524
  %669 = vmatprep.subr.bf16.mxu0 %v529
  %670 = vmatpush1.bf16.msra.mxu0 %v528
  %671 = vmatprep.subr.bf16.mxu0 %v533
  %672 = vmatpush1.bf16.msra.mxu0 %v532
  %673 = vmatprep.mubr.bf16.mxu0 %v191
  %674 = vmatmul.mubr.bf16.gmra.mrb[0].mxu0 %v190
  %v675 = vpop.f32.mrb[0].mxu0
  %v676 = vadd.f32 %v269, %v675
  %v677 = vpop.f32.mrb[0].mxu0
  %v678 = vadd.f32 %v273, %v677
  %v679 = vpop.f32.mrb[0].mxu0
  %v680 = vadd.f32 %v269, %v679
  %v681 = vpop.f32.mrb[0].mxu0
  %v682 = vadd.f32 %v273, %v681
  %683 = vdwg.mxu0
  %v684 = vmax.f32 %v633, 0.0
  %v685 = vmax.f32 %v635, 0.0
  %v686 = vmax.f32 %v676, 0.0
  %v687 = vmax.f32 %v678, 0.0
  %v688 = vmax.f32 %v637, 0.0
  %v689 = vmax.f32 %v639, 0.0
  %v690 = vmax.f32 %v680, 0.0
  %v691 = vmax.f32 %v682, 0.0
  %v692 = vpack.c.bf16 %v688, %v684
  %v693 = vpack.c.bf16 %v689, %v685
  %v694 = vpack.c.bf16 %v690, %v686
  %v695 = vpack.c.bf16 %v691, %v687
  %v696 = vld [vmem:[%s5] sm:$0xff]
  %v697 = vld [vmem:[%s5 + $0x8] sm:$0xff]
  %v698 = vld [vmem:[%s5 + $0x10] sm:$0xff]
  %v699 = vld [vmem:[%s5 + $0x18] sm:$0xf]
  %v700 = vld [vmem:[%s5 + $0x1c] sm:$0xff]
  %v701 = vld [vmem:[%s5 + $0x24] sm:$0xff]
  %v702 = vld [vmem:[%s5 + $0x2c] sm:$0xff]
  %v703 = vld [vmem:[%s5 + $0x34] sm:$0xf]
  %v704 = vld [vmem:[%s5 + $0x38] sm:$0xff]
  %v705 = vld [vmem:[%s5 + $0x40] sm:$0xff]
  %v706 = vld [vmem:[%s5 + $0x48] sm:$0xff]
  %v707 = vld [vmem:[%s5 + $0x50] sm:$0xf]
  %v708 = vld [vmem:[%s5 + $0x54] sm:$0xff]
  %v709 = vld [vmem:[%s5 + $0x5c] sm:$0xff]
  %v710 = vld [vmem:[%s5 + $0x64] sm:$0xff]
  %v711 = vld [vmem:[%s5 + $0x6c] sm:$0xf]
  %v712 = vld [vmem:[%s5 + $0x70] sm:$0xff]
  %v713 = vld [vmem:[%s5 + $0x78] sm:$0xff]
  %v714 = vld [vmem:[%s5 + $0x80] sm:$0xff]
  %v715 = vld [vmem:[%s5 + $0x88] sm:$0xf]
  %v716 = vld [vmem:[%s5 + $0x8c] sm:$0xff]
  %v717 = vld [vmem:[%s5 + $0x94] sm:$0xff]
  %v718 = vld [vmem:[%s5 + $0x9c] sm:$0xff]
  %v719 = vld [vmem:[%s5 + $0xa4] sm:$0xf]
  %v720 = vld [vmem:[%s5 + $0xa8] sm:$0xff]
  %v721 = vld [vmem:[%s5 + $0xb0] sm:$0xff]
  %v722 = vld [vmem:[%s5 + $0xb8] sm:$0xff]
  %v723 = vld [vmem:[%s5 + $0xc0] sm:$0xf]
  %v724 = vld [vmem:[%s5 + $0xc4] sm:$0xff]
  %v725 = vld [vmem:[%s5 + $0xcc] sm:$0xff]
  %v726 = vld [vmem:[%s5 + $0xd4] sm:$0xff]
  %v727 = vld [vmem:[%s5 + $0xdc] sm:$0xf]
  %v728 = vld [vmem:[%s5 + $0xe0] sm:$0xff]
  %v729 = vld [vmem:[%s5 + $0xe8] sm:$0xff]
  %v730 = vld [vmem:[%s5 + $0xf0] sm:$0xff]
  %v731 = vld [vmem:[%s5 + $0xf8] sm:$0xf]
  %v732 = vld [vmem:[%s5 + $0xfc] sm:$0xff]
  %v733 = vld [vmem:[%s5 + $0x104] sm:$0xff]
  %v734 = vld [vmem:[%s5 + $0x10c] sm:$0xff]
  %v735 = vld [vmem:[%s5 + $0x114] sm:$0xf]
  %v736 = vld [vmem:[%s5 + $0x118] sm:$0xff]
  %v737 = vld [vmem:[%s5 + $0x120] sm:$0xff]
  %v738 = vld [vmem:[%s5 + $0x128] sm:$0xff]
  %v739 = vld [vmem:[%s5 + $0x130] sm:$0xf]
  %v740 = vld [vmem:[%s5 + $0x134] sm:$0xff]
  %v741 = vld [vmem:[%s5 + $0x13c] sm:$0xff]
  %v742 = vld [vmem:[%s5 + $0x144] sm:$0xff]
  %v743 = vld [vmem:[%s5 + $0x14c] sm:$0xf]
  %v744 = vld [vmem:[%s5 + $0x150] sm:$0xff]
  %v745 = vld [vmem:[%s5 + $0x158] sm:$0xff]
  %v746 = vld [vmem:[%s5 + $0x160] sm:$0xff]
  %v747 = vld [vmem:[%s5 + $0x168] sm:$0xf]
  %v748 = vld [vmem:[%s5 + $0x16c] sm:$0xff]
  %v749 = vld [vmem:[%s5 + $0x174] sm:$0xff]
  %v750 = vld [vmem:[%s5 + $0x17c] sm:$0xff]
  %v751 = vld [vmem:[%s5 + $0x184] sm:$0xf]
  %v752 = vld [vmem:[%s5 + $0x188] sm:$0xff]
  %v753 = vld [vmem:[%s5 + $0x190] sm:$0xff]
  %v754 = vld [vmem:[%s5 + $0x198] sm:$0xff]
  %v755 = vld [vmem:[%s5 + $0x1a0] sm:$0xf]
  %v756 = vld [vmem:[%s5 + $0x1a4] sm:$0xff]
  %v757 = vld [vmem:[%s5 + $0x1ac] sm:$0xff]
  %v758 = vld [vmem:[%s5 + $0x1b4] sm:$0xff]
  %v759 = vld [vmem:[%s5 + $0x1bc] sm:$0xf]
  %v760 = vld [vmem:[%s5 + $0x1c0] sm:$0xff]
  %v761 = vld [vmem:[%s5 + $0x1c8] sm:$0xff]
  %v762 = vld [vmem:[%s5 + $0x1d0] sm:$0xff]
  %v763 = vld [vmem:[%s5 + $0x1d8] sm:$0xf]
  %v764 = vld [vmem:[%s5 + $0x1dc] sm:$0xff]
  %v765 = vld [vmem:[%s5 + $0x1e4] sm:$0xff]
  %v766 = vld [vmem:[%s5 + $0x1ec] sm:$0xff]
  %v767 = vld [vmem:[%s5 + $0x1f4] sm:$0xf]
  %v768 = vld [vmem:[%s5 + $0x1f8] sm:$0xff]
  %v769 = vld [vmem:[%s5 + $0x200] sm:$0xff]
  %v770 = vld [vmem:[%s5 + $0x208] sm:$0xff]
  %v771 = vld [vmem:[%s5 + $0x210] sm:$0xf]
  %v772 = vld [vmem:[%s5 + $0x214] sm:$0xff]
  %v773 = vld [vmem:[%s5 + $0x21c] sm:$0xff]
  %v774 = vld [vmem:[%s5 + $0x224] sm:$0xff]
  %v775 = vld [vmem:[%s5 + $0x22c] sm:$0xf]
  %v776 = vld [vmem:[%s5 + $0x230] sm:$0xff]
  %v777 = vld [vmem:[%s5 + $0x238] sm:$0xff]
  %v778 = vld [vmem:[%s5 + $0x240] sm:$0xff]
  %v779 = vld [vmem:[%s5 + $0x248] sm:$0xf]
  %v780 = vld [vmem:[%s5 + $0x24c] sm:$0xff]
  %v781 = vld [vmem:[%s5 + $0x254] sm:$0xff]
  %v782 = vld [vmem:[%s5 + $0x25c] sm:$0xff]
  %v783 = vld [vmem:[%s5 + $0x264] sm:$0xf]
  %v784 = vld [vmem:[%s5 + $0x268] sm:$0xff]
  %v785 = vld [vmem:[%s5 + $0x270] sm:$0xff]
  %v786 = vld [vmem:[%s5 + $0x278] sm:$0xff]
  %v787 = vld [vmem:[%s5 + $0x280] sm:$0xf]
  %v788 = vld [vmem:[%s5 + $0x284] sm:$0xff]
  %v789 = vld [vmem:[%s5 + $0x28c] sm:$0xff]
  %v790 = vld [vmem:[%s5 + $0x294] sm:$0xff]
  %v791 = vld [vmem:[%s5 + $0x29c] sm:$0xf]
  %v792 = vld [vmem:[%s5 + $0x2a0] sm:$0xff]
  %v793 = vld [vmem:[%s5 + $0x2a8] sm:$0xff]
  %v794 = vld [vmem:[%s5 + $0x2b0] sm:$0xff]
  %v795 = vld [vmem:[%s5 + $0x2b8] sm:$0xf]
  %v796 = vld [vmem:[%s5 + $0x2bc] sm:$0xff]
  %v797 = vld [vmem:[%s5 + $0x2c4] sm:$0xff]
  %v798 = vld [vmem:[%s5 + $0x2cc] sm:$0xff]
  %v799 = vld [vmem:[%s5 + $0x2d4] sm:$0xf]
  %v800 = vld [vmem:[%s5 + $0x2d8] sm:$0xff]
  %v801 = vld [vmem:[%s5 + $0x2e0] sm:$0xff]
  %v802 = vld [vmem:[%s5 + $0x2e8] sm:$0xff]
  %v803 = vld [vmem:[%s5 + $0x2f0] sm:$0xf]
  %v804 = vld [vmem:[%s5 + $0x2f4] sm:$0xff]
  %v805 = vld [vmem:[%s5 + $0x2fc] sm:$0xff]
  %v806 = vld [vmem:[%s5 + $0x304] sm:$0xff]
  %v807 = vld [vmem:[%s5 + $0x30c] sm:$0xf]
  %v808 = vld [vmem:[%s5 + $0x310] sm:$0xff]
  %v809 = vld [vmem:[%s5 + $0x318] sm:$0xff]
  %v810 = vld [vmem:[%s5 + $0x320] sm:$0xff]
  %v811 = vld [vmem:[%s5 + $0x328] sm:$0xf]
  %v812 = vld [vmem:[%s5 + $0x32c] sm:$0xff]
  %v813 = vld [vmem:[%s5 + $0x334] sm:$0xff]
  %v814 = vld [vmem:[%s5 + $0x33c] sm:$0xff]
  %v815 = vld [vmem:[%s5 + $0x344] sm:$0xf]
  %v816 = vld [vmem:[%s5 + $0x348] sm:$0xff]
  %v817 = vld [vmem:[%s5 + $0x350] sm:$0xff]
  %v818 = vld [vmem:[%s5 + $0x358] sm:$0xff]
  %v819 = vld [vmem:[%s5 + $0x360] sm:$0xf]
  %v820 = vld [vmem:[%s5 + $0x364] sm:$0xff]
  %v821 = vld [vmem:[%s5 + $0x36c] sm:$0xff]
  %v822 = vld [vmem:[%s5 + $0x374] sm:$0xff]
  %v823 = vld [vmem:[%s5 + $0x37c] sm:$0xf]
  %v824 = vld [vmem:[%s5 + $0x380] sm:$0xff]
  %v825 = vld [vmem:[%s5 + $0x388] sm:$0xff]
  %v826 = vld [vmem:[%s5 + $0x390] sm:$0xff]
  %v827 = vld [vmem:[%s5 + $0x398] sm:$0xf]
  %v828 = vld [vmem:[%s5 + $0x39c] sm:$0xff]
  %v829 = vld [vmem:[%s5 + $0x3a4] sm:$0xff]
  %v830 = vld [vmem:[%s5 + $0x3ac] sm:$0xff]
  %v831 = vld [vmem:[%s5 + $0x3b4] sm:$0xf]
  %v832 = vld [vmem:[%s5 + $0x3b8] sm:$0xff]
  %v833 = vld [vmem:[%s5 + $0x3c0] sm:$0xff]
  %v834 = vld [vmem:[%s5 + $0x3c8] sm:$0xff]
  %v835 = vld [vmem:[%s5 + $0x3d0] sm:$0xf]
  %v836 = vld [vmem:[%s5 + $0x3d4] sm:$0xff]
  %v837 = vld [vmem:[%s5 + $0x3dc] sm:$0xff]
  %v838 = vld [vmem:[%s5 + $0x3e4] sm:$0xff]
  %v839 = vld [vmem:[%s5 + $0x3ec] sm:$0xf]
  %v840 = vld [vmem:[%s5 + $0x3f0] sm:$0xff]
  %v841 = vld [vmem:[%s5 + $0x3f8] sm:$0xff]
  %v842 = vld [vmem:[%s5 + $0x400] sm:$0xff]
  %v843 = vld [vmem:[%s5 + $0x408] sm:$0xf]
  %v844 = vld [vmem:[%s5 + $0x40c] sm:$0xff]
  %v845 = vld [vmem:[%s5 + $0x414] sm:$0xff]
  %v846 = vld [vmem:[%s5 + $0x41c] sm:$0xff]
  %v847 = vld [vmem:[%s5 + $0x424] sm:$0xf]
  %v848 = vld [vmem:[%s5 + $0x428] sm:$0xff]
  %v849 = vld [vmem:[%s5 + $0x430] sm:$0xff]
  %v850 = vld [vmem:[%s5 + $0x438] sm:$0xff]
  %v851 = vld [vmem:[%s5 + $0x440] sm:$0xf]
  %v852 = vld [vmem:[%s5 + $0x444] sm:$0xff]
  %v853 = vld [vmem:[%s5 + $0x44c] sm:$0xff]
  %v854 = vld [vmem:[%s5 + $0x454] sm:$0xff]
  %v855 = vld [vmem:[%s5 + $0x45c] sm:$0xf]
  %v856 = vld [vmem:[%s5 + $0x460] sm:$0xff]
  %v857 = vld [vmem:[%s5 + $0x468] sm:$0xff]
  %v858 = vld [vmem:[%s5 + $0x470] sm:$0xff]
  %v859 = vld [vmem:[%s5 + $0x478] sm:$0xf]
  %v860 = vld [vmem:[%s5 + $0x47c] sm:$0xff]
  %v861 = vld [vmem:[%s5 + $0x484] sm:$0xff]
  %v862 = vld [vmem:[%s5 + $0x48c] sm:$0xff]
  %v863 = vld [vmem:[%s5 + $0x494] sm:$0xf]
  %v864 = vld [vmem:[%s5 + $0x498] sm:$0xff]
  %v865 = vld [vmem:[%s5 + $0x4a0] sm:$0xff]
  %v866 = vld [vmem:[%s5 + $0x4a8] sm:$0xff]
  %v867 = vld [vmem:[%s5 + $0x4b0] sm:$0xf]
  %v868 = vld [vmem:[%s5 + $0x4b4] sm:$0xff]
  %v869 = vld [vmem:[%s5 + $0x4bc] sm:$0xff]
  %v870 = vld [vmem:[%s5 + $0x4c4] sm:$0xff]
  %v871 = vld [vmem:[%s5 + $0x4cc] sm:$0xf]
  %v872 = vld [vmem:[%s5 + $0x4d0] sm:$0xff]
  %v873 = vld [vmem:[%s5 + $0x4d8] sm:$0xff]
  %v874 = vld [vmem:[%s5 + $0x4e0] sm:$0xff]
  %v875 = vld [vmem:[%s5 + $0x4e8] sm:$0xf]
  %v876 = vld [vmem:[%s5 + $0x4ec] sm:$0xff]
  %v877 = vld [vmem:[%s5 + $0x4f4] sm:$0xff]
  %v878 = vld [vmem:[%s5 + $0x4fc] sm:$0xff]
  %v879 = vld [vmem:[%s5 + $0x504] sm:$0xf]
  %v880 = vld [vmem:[%s5 + $0x508] sm:$0xff]
  %v881 = vld [vmem:[%s5 + $0x510] sm:$0xff]
  %v882 = vld [vmem:[%s5 + $0x518] sm:$0xff]
  %v883 = vld [vmem:[%s5 + $0x520] sm:$0xf]
  %v884 = vld [vmem:[%s5 + $0x524] sm:$0xff]
  %v885 = vld [vmem:[%s5 + $0x52c] sm:$0xff]
  %v886 = vld [vmem:[%s5 + $0x534] sm:$0xff]
  %v887 = vld [vmem:[%s5 + $0x53c] sm:$0xf]
  %v888 = vld [vmem:[%s5 + $0x540] sm:$0xff]
  %v889 = vld [vmem:[%s5 + $0x548] sm:$0xff]
  %v890 = vld [vmem:[%s5 + $0x550] sm:$0xff]
  %v891 = vld [vmem:[%s5 + $0x558] sm:$0xf]
  %v892 = vld [vmem:[%s5 + $0x55c] sm:$0xff]
  %v893 = vld [vmem:[%s5 + $0x564] sm:$0xff]
  %v894 = vld [vmem:[%s5 + $0x56c] sm:$0xff]
  %v895 = vld [vmem:[%s5 + $0x574] sm:$0xf]
  %v896 = vld [vmem:[%s5 + $0x578] sm:$0xff]
  %v897 = vld [vmem:[%s5 + $0x580] sm:$0xff]
  %v898 = vld [vmem:[%s5 + $0x588] sm:$0xff]
  %v899 = vld [vmem:[%s5 + $0x590] sm:$0xf]
  %v900 = vld [vmem:[%s5 + $0x594] sm:$0xff]
  %v901 = vld [vmem:[%s5 + $0x59c] sm:$0xff]
  %v902 = vld [vmem:[%s5 + $0x5a4] sm:$0xff]
  %v903 = vld [vmem:[%s5 + $0x5ac] sm:$0xf]
  %v904 = vld [vmem:[%s5 + $0x5b0] sm:$0xff]
  %v905 = vld [vmem:[%s5 + $0x5b8] sm:$0xff]
  %v906 = vld [vmem:[%s5 + $0x5c0] sm:$0xff]
  %v907 = vld [vmem:[%s5 + $0x5c8] sm:$0xf]
  %v908 = vld [vmem:[%s5 + $0x5cc] sm:$0xff]
  %v909 = vld [vmem:[%s5 + $0x5d4] sm:$0xff]
  %v910 = vld [vmem:[%s5 + $0x5dc] sm:$0xff]
  %v911 = vld [vmem:[%s5 + $0x5e4] sm:$0xf]
  %v912 = vld [vmem:[%s5 + $0x5e8] sm:$0xff]
  %v913 = vld [vmem:[%s5 + $0x5f0] sm:$0xff]
  %v914 = vld [vmem:[%s5 + $0x5f8] sm:$0xff]
  %v915 = vld [vmem:[%s5 + $0x600] sm:$0xf]
  %v916 = vld [vmem:[%s5 + $0x604] sm:$0xff]
  %v917 = vld [vmem:[%s5 + $0x60c] sm:$0xff]
  %v918 = vld [vmem:[%s5 + $0x614] sm:$0xff]
  %v919 = vld [vmem:[%s5 + $0x61c] sm:$0xf]
  %v920 = vld [vmem:[%s5 + $0x620] sm:$0xff]
  %v921 = vld [vmem:[%s5 + $0x628] sm:$0xff]
  %v922 = vld [vmem:[%s5 + $0x630] sm:$0xff]
  %v923 = vld [vmem:[%s5 + $0x638] sm:$0xf]
  %v924 = vld [vmem:[%s5 + $0x63c] sm:$0xff]
  %v925 = vld [vmem:[%s5 + $0x644] sm:$0xff]
  %v926 = vld [vmem:[%s5 + $0x64c] sm:$0xff]
  %v927 = vld [vmem:[%s5 + $0x654] sm:$0xf]
  %v928 = vld [vmem:[%s5 + $0x658] sm:$0xff]
  %v929 = vld [vmem:[%s5 + $0x660] sm:$0xff]
  %v930 = vld [vmem:[%s5 + $0x668] sm:$0xff]
  %v931 = vld [vmem:[%s5 + $0x670] sm:$0xf]
  %v932 = vld [vmem:[%s5 + $0x674] sm:$0xff]
  %v933 = vld [vmem:[%s5 + $0x67c] sm:$0xff]
  %v934 = vld [vmem:[%s5 + $0x684] sm:$0xff]
  %v935 = vld [vmem:[%s5 + $0x68c] sm:$0xf]
  %v936 = vld [vmem:[%s5 + $0x690] sm:$0xff]
  %v937 = vld [vmem:[%s5 + $0x698] sm:$0xff]
  %v938 = vld [vmem:[%s5 + $0x6a0] sm:$0xff]
  %v939 = vld [vmem:[%s5 + $0x6a8] sm:$0xf]
  %v940 = vld [vmem:[%s5 + $0x6ac] sm:$0xff]
  %v941 = vld [vmem:[%s5 + $0x6b4] sm:$0xff]
  %v942 = vld [vmem:[%s5 + $0x6bc] sm:$0xff]
  %v943 = vld [vmem:[%s5 + $0x6c4] sm:$0xf]
  %v944 = vld [vmem:[%s5 + $0x6c8] sm:$0xff]
  %v945 = vld [vmem:[%s5 + $0x6d0] sm:$0xff]
  %v946 = vld [vmem:[%s5 + $0x6d8] sm:$0xff]
  %v947 = vld [vmem:[%s5 + $0x6e0] sm:$0xf]
  %v948 = vld [vmem:[%s5 + $0x6e4] sm:$0xff]
  %v949 = vld [vmem:[%s5 + $0x6ec] sm:$0xff]
  %v950 = vld [vmem:[%s5 + $0x6f4] sm:$0xff]
  %v951 = vld [vmem:[%s5 + $0x6fc] sm:$0xf]
  %v952 = vld [vmem:[%s6] sm:$0x7f]
  %v954 = vlaneseq
  %v955 = vshrl.u32 %v954, 7
  %v956 = vsub.s32 0, %v955
  %v957 = vrot.slane %v952, %v956
  %v958 = vlaneseq
  %v959 = vshrl.u32 %v958, 7
  %v960 = vsub.s32 1, %v959
  %v961 = vrot.slane %v952, %v960
  %v962 = vlaneseq
  %v963 = vshrl.u32 %v962, 7
  %v964 = vsub.s32 2, %v963
  %v965 = vrot.slane %v952, %v964
  %v966 = vlaneseq
  %v967 = vshrl.u32 %v966, 7
  %v968 = vsub.s32 3, %v967
  %v969 = vrot.slane %v952, %v968
  %v970 = vlaneseq
  %v971 = vshrl.u32 %v970, 7
  %v972 = vsub.s32 4, %v971
  %v973 = vrot.slane %v952, %v972
  %v974 = vlaneseq
  %v975 = vshrl.u32 %v974, 7
  %v976 = vsub.s32 5, %v975
  %v977 = vrot.slane %v952, %v976
  %v978 = vlaneseq
  %v979 = vshrl.u32 %v978, 7
  %v980 = vsub.s32 6, %v979
  %v981 = vrot.slane %v952, %v980
  %v1245 = vunpack.c.l.b16 %v696
  %v1246 = vunpack.c.h.b16 %v696
  %v1247 = vunpack.c.l.b16 %v697
  %v1248 = vunpack.c.h.b16 %v697
  %v1249 = vunpack.c.l.b16 %v698
  %v1250 = vunpack.c.h.b16 %v698
  %v1251 = vunpack.c.l.b16 %v699
  %v1252 = vunpack.c.l.b16 %v700
  %v1253 = vunpack.c.h.b16 %v700
  %v1254 = vunpack.c.l.b16 %v701
  %v1255 = vunpack.c.h.b16 %v701
  %v1256 = vunpack.c.l.b16 %v702
  %v1257 = vunpack.c.h.b16 %v702
  %v1258 = vunpack.c.l.b16 %v703
  %v1259 = vunpack.c.l.b16 %v704
  %v1260 = vunpack.c.h.b16 %v704
  %v1261 = vunpack.c.l.b16 %v705
  %v1262 = vunpack.c.h.b16 %v705
  %v1263 = vunpack.c.l.b16 %v706
  %v1264 = vunpack.c.h.b16 %v706
  %v1265 = vunpack.c.l.b16 %v707
  %v1266 = vunpack.c.l.b16 %v708
  %v1267 = vunpack.c.h.b16 %v708
  %v1268 = vunpack.c.l.b16 %v709
  %v1269 = vunpack.c.h.b16 %v709
  %v1270 = vunpack.c.l.b16 %v710
  %v1271 = vunpack.c.h.b16 %v710
  %v1272 = vunpack.c.l.b16 %v711
  %v1273 = vunpack.c.l.b16 %v712
  %v1274 = vunpack.c.h.b16 %v712
  %v1275 = vunpack.c.l.b16 %v713
  %v1276 = vunpack.c.h.b16 %v713
  %v1277 = vunpack.c.l.b16 %v714
  %v1278 = vunpack.c.h.b16 %v714
  %v1279 = vunpack.c.l.b16 %v715
  %v1280 = vunpack.c.l.b16 %v716
  %v1281 = vunpack.c.h.b16 %v716
  %v1282 = vunpack.c.l.b16 %v717
  %v1283 = vunpack.c.h.b16 %v717
  %v1284 = vunpack.c.l.b16 %v718
  %v1285 = vunpack.c.h.b16 %v718
  %v1286 = vunpack.c.l.b16 %v719
  %v1287 = vunpack.c.l.b16 %v720
  %v1288 = vunpack.c.h.b16 %v720
  %v1289 = vunpack.c.l.b16 %v721
  %v1290 = vunpack.c.h.b16 %v721
  %v1291 = vunpack.c.l.b16 %v722
  %v1292 = vunpack.c.h.b16 %v722
  %v1293 = vunpack.c.l.b16 %v723
  %v1294 = vunpack.c.l.b16 %v724
  %v1295 = vunpack.c.h.b16 %v724
  %v1296 = vunpack.c.l.b16 %v725
  %v1297 = vunpack.c.h.b16 %v725
  %v1298 = vunpack.c.l.b16 %v726
  %v1299 = vunpack.c.h.b16 %v726
  %v1300 = vunpack.c.l.b16 %v727
  %v1301 = vunpack.c.l.b16 %v728
  %v1302 = vunpack.c.h.b16 %v728
  %v1303 = vunpack.c.l.b16 %v729
  %v1304 = vunpack.c.h.b16 %v729
  %v1305 = vunpack.c.l.b16 %v730
  %v1306 = vunpack.c.h.b16 %v730
  %v1307 = vunpack.c.l.b16 %v731
  %v1308 = vunpack.c.l.b16 %v732
  %v1309 = vunpack.c.h.b16 %v732
  %v1310 = vunpack.c.l.b16 %v733
  %v1311 = vunpack.c.h.b16 %v733
  %v1312 = vunpack.c.l.b16 %v734
  %v1313 = vunpack.c.h.b16 %v734
  %v1314 = vunpack.c.l.b16 %v735
  %v1315 = vunpack.c.l.b16 %v736
  %v1316 = vunpack.c.h.b16 %v736
  %v1317 = vunpack.c.l.b16 %v737
  %v1318 = vunpack.c.h.b16 %v737
  %v1319 = vunpack.c.l.b16 %v738
  %v1320 = vunpack.c.h.b16 %v738
  %v1321 = vunpack.c.l.b16 %v739
  %v1322 = vunpack.c.l.b16 %v740
  %v1323 = vunpack.c.h.b16 %v740
  %v1324 = vunpack.c.l.b16 %v741
  %v1325 = vunpack.c.h.b16 %v741
  %v1326 = vunpack.c.l.b16 %v742
  %v1327 = vunpack.c.h.b16 %v742
  %v1328 = vunpack.c.l.b16 %v743
  %v1329 = vunpack.c.l.b16 %v744
  %v1330 = vunpack.c.h.b16 %v744
  %v1331 = vunpack.c.l.b16 %v745
  %v1332 = vunpack.c.h.b16 %v745
  %v1333 = vunpack.c.l.b16 %v746
  %v1334 = vunpack.c.h.b16 %v746
  %v1335 = vunpack.c.l.b16 %v747
  %v1336 = vunpack.c.l.b16 %v748
  %v1337 = vunpack.c.h.b16 %v748
  %v1338 = vunpack.c.l.b16 %v749
  %v1339 = vunpack.c.h.b16 %v749
  %v1340 = vunpack.c.l.b16 %v750
  %v1341 = vunpack.c.h.b16 %v750
  %v1342 = vunpack.c.l.b16 %v751
  %v1343 = vunpack.c.l.b16 %v752
  %v1344 = vunpack.c.h.b16 %v752
  %v1345 = vunpack.c.l.b16 %v753
  %v1346 = vunpack.c.h.b16 %v753
  %v1347 = vunpack.c.l.b16 %v754
  %v1348 = vunpack.c.h.b16 %v754
  %v1349 = vunpack.c.l.b16 %v755
  %v1350 = vunpack.c.l.b16 %v756
  %v1351 = vunpack.c.h.b16 %v756
  %v1352 = vunpack.c.l.b16 %v757
  %v1353 = vunpack.c.h.b16 %v757
  %v1354 = vunpack.c.l.b16 %v758
  %v1355 = vunpack.c.h.b16 %v758
  %v1356 = vunpack.c.l.b16 %v759
  %v1357 = vunpack.c.l.b16 %v760
  %v1358 = vunpack.c.h.b16 %v760
  %v1359 = vunpack.c.l.b16 %v761
  %v1360 = vunpack.c.h.b16 %v761
  %v1361 = vunpack.c.l.b16 %v762
  %v1362 = vunpack.c.h.b16 %v762
  %v1363 = vunpack.c.l.b16 %v763
  %v1364 = vunpack.c.l.b16 %v764
  %v1365 = vunpack.c.h.b16 %v764
  %v1366 = vunpack.c.l.b16 %v765
  %v1367 = vunpack.c.h.b16 %v765
  %v1368 = vunpack.c.l.b16 %v766
  %v1369 = vunpack.c.h.b16 %v766
  %v1370 = vunpack.c.l.b16 %v767
  %v1371 = vunpack.c.l.b16 %v768
  %v1372 = vunpack.c.h.b16 %v768
  %v1373 = vunpack.c.l.b16 %v769
  %v1374 = vunpack.c.h.b16 %v769
  %v1375 = vunpack.c.l.b16 %v770
  %v1376 = vunpack.c.h.b16 %v770
  %v1377 = vunpack.c.l.b16 %v771
  %v1378 = vunpack.c.l.b16 %v772
  %v1379 = vunpack.c.h.b16 %v772
  %v1380 = vunpack.c.l.b16 %v773
  %v1381 = vunpack.c.h.b16 %v773
  %v1382 = vunpack.c.l.b16 %v774
  %v1383 = vunpack.c.h.b16 %v774
  %v1384 = vunpack.c.l.b16 %v775
  %v1385 = vunpack.c.l.b16 %v776
  %v1386 = vunpack.c.h.b16 %v776
  %v1387 = vunpack.c.l.b16 %v777
  %v1388 = vunpack.c.h.b16 %v777
  %v1389 = vunpack.c.l.b16 %v778
  %v1390 = vunpack.c.h.b16 %v778
  %v1391 = vunpack.c.l.b16 %v779
  %v1392 = vunpack.c.l.b16 %v780
  %v1393 = vunpack.c.h.b16 %v780
  %v1394 = vunpack.c.l.b16 %v781
  %v1395 = vunpack.c.h.b16 %v781
  %v1396 = vunpack.c.l.b16 %v782
  %v1397 = vunpack.c.h.b16 %v782
  %v1398 = vunpack.c.l.b16 %v783
  %v1399 = vunpack.c.l.b16 %v784
  %v1400 = vunpack.c.h.b16 %v784
  %v1401 = vunpack.c.l.b16 %v785
  %v1402 = vunpack.c.h.b16 %v785
  %v1403 = vunpack.c.l.b16 %v786
  %v1404 = vunpack.c.h.b16 %v786
  %v1405 = vunpack.c.l.b16 %v787
  %v1406 = vunpack.c.l.b16 %v788
  %v1407 = vunpack.c.h.b16 %v788
  %v1408 = vunpack.c.l.b16 %v789
  %v1409 = vunpack.c.h.b16 %v789
  %v1410 = vunpack.c.l.b16 %v790
  %v1411 = vunpack.c.h.b16 %v790
  %v1412 = vunpack.c.l.b16 %v791
  %v1413 = vunpack.c.l.b16 %v792
  %v1414 = vunpack.c.h.b16 %v792
  %v1415 = vunpack.c.l.b16 %v793
  %v1416 = vunpack.c.h.b16 %v793
  %v1417 = vunpack.c.l.b16 %v794
  %v1418 = vunpack.c.h.b16 %v794
  %v1419 = vunpack.c.l.b16 %v795
  %v1420 = vunpack.c.l.b16 %v796
  %v1421 = vunpack.c.h.b16 %v796
  %v1422 = vunpack.c.l.b16 %v797
  %v1423 = vunpack.c.h.b16 %v797
  %v1424 = vunpack.c.l.b16 %v798
  %v1425 = vunpack.c.h.b16 %v798
  %v1426 = vunpack.c.l.b16 %v799
  %v1427 = vunpack.c.l.b16 %v800
  %v1428 = vunpack.c.h.b16 %v800
  %v1429 = vunpack.c.l.b16 %v801
  %v1430 = vunpack.c.h.b16 %v801
  %v1431 = vunpack.c.l.b16 %v802
  %v1432 = vunpack.c.h.b16 %v802
  %v1433 = vunpack.c.l.b16 %v803
  %v1434 = vunpack.c.l.b16 %v804
  %v1435 = vunpack.c.h.b16 %v804
  %v1436 = vunpack.c.l.b16 %v805
  %v1437 = vunpack.c.h.b16 %v805
  %v1438 = vunpack.c.l.b16 %v806
  %v1439 = vunpack.c.h.b16 %v806
  %v1440 = vunpack.c.l.b16 %v807
  %v1441 = vunpack.c.l.b16 %v808
  %v1442 = vunpack.c.h.b16 %v808
  %v1443 = vunpack.c.l.b16 %v809
  %v1444 = vunpack.c.h.b16 %v809
  %v1445 = vunpack.c.l.b16 %v810
  %v1446 = vunpack.c.h.b16 %v810
  %v1447 = vunpack.c.l.b16 %v811
  %v1448 = vunpack.c.l.b16 %v812
  %v1449 = vunpack.c.h.b16 %v812
  %v1450 = vunpack.c.l.b16 %v813
  %v1451 = vunpack.c.h.b16 %v813
  %v1452 = vunpack.c.l.b16 %v814
  %v1453 = vunpack.c.h.b16 %v814
  %v1454 = vunpack.c.l.b16 %v815
  %v1455 = vunpack.c.l.b16 %v816
  %v1456 = vunpack.c.h.b16 %v816
  %v1457 = vunpack.c.l.b16 %v817
  %v1458 = vunpack.c.h.b16 %v817
  %v1459 = vunpack.c.l.b16 %v818
  %v1460 = vunpack.c.h.b16 %v818
  %v1461 = vunpack.c.l.b16 %v819
  %v1462 = vunpack.c.l.b16 %v820
  %v1463 = vunpack.c.h.b16 %v820
  %v1464 = vunpack.c.l.b16 %v821
  %v1465 = vunpack.c.h.b16 %v821
  %v1466 = vunpack.c.l.b16 %v822
  %v1467 = vunpack.c.h.b16 %v822
  %v1468 = vunpack.c.l.b16 %v823
  %v1469 = vunpack.c.l.b16 %v824
  %v1470 = vunpack.c.h.b16 %v824
  %v1471 = vunpack.c.l.b16 %v825
  %v1472 = vunpack.c.h.b16 %v825
  %v1473 = vunpack.c.l.b16 %v826
  %v1474 = vunpack.c.h.b16 %v826
  %v1475 = vunpack.c.l.b16 %v827
  %v1476 = vunpack.c.l.b16 %v828
  %v1477 = vunpack.c.h.b16 %v828
  %v1478 = vunpack.c.l.b16 %v829
  %v1479 = vunpack.c.h.b16 %v829
  %v1480 = vunpack.c.l.b16 %v830
  %v1481 = vunpack.c.h.b16 %v830
  %v1482 = vunpack.c.l.b16 %v831
  %v1483 = vunpack.c.l.b16 %v832
  %v1484 = vunpack.c.h.b16 %v832
  %v1485 = vunpack.c.l.b16 %v833
  %v1486 = vunpack.c.h.b16 %v833
  %v1487 = vunpack.c.l.b16 %v834
  %v1488 = vunpack.c.h.b16 %v834
  %v1489 = vunpack.c.l.b16 %v835
  %v1490 = vunpack.c.l.b16 %v836
  %v1491 = vunpack.c.h.b16 %v836
  %v1492 = vunpack.c.l.b16 %v837
  %v1493 = vunpack.c.h.b16 %v837
  %v1494 = vunpack.c.l.b16 %v838
  %v1495 = vunpack.c.h.b16 %v838
  %v1496 = vunpack.c.l.b16 %v839
  %v1497 = vunpack.c.l.b16 %v840
  %v1498 = vunpack.c.h.b16 %v840
  %v1499 = vunpack.c.l.b16 %v841
  %v1500 = vunpack.c.h.b16 %v841
  %v1501 = vunpack.c.l.b16 %v842
  %v1502 = vunpack.c.h.b16 %v842
  %v1503 = vunpack.c.l.b16 %v843
  %v1504 = vunpack.c.l.b16 %v844
  %v1505 = vunpack.c.h.b16 %v844
  %v1506 = vunpack.c.l.b16 %v845
  %v1507 = vunpack.c.h.b16 %v845
  %v1508 = vunpack.c.l.b16 %v846
  %v1509 = vunpack.c.h.b16 %v846
  %v1510 = vunpack.c.l.b16 %v847
  %v1511 = vunpack.c.l.b16 %v848
  %v1512 = vunpack.c.h.b16 %v848
  %v1513 = vunpack.c.l.b16 %v849
  %v1514 = vunpack.c.h.b16 %v849
  %v1515 = vunpack.c.l.b16 %v850
  %v1516 = vunpack.c.h.b16 %v850
  %v1517 = vunpack.c.l.b16 %v851
  %v1518 = vunpack.c.l.b16 %v852
  %v1519 = vunpack.c.h.b16 %v852
  %v1520 = vunpack.c.l.b16 %v853
  %v1521 = vunpack.c.h.b16 %v853
  %v1522 = vunpack.c.l.b16 %v854
  %v1523 = vunpack.c.h.b16 %v854
  %v1524 = vunpack.c.l.b16 %v855
  %v1525 = vunpack.c.l.b16 %v856
  %v1526 = vunpack.c.h.b16 %v856
  %v1527 = vunpack.c.l.b16 %v857
  %v1528 = vunpack.c.h.b16 %v857
  %v1529 = vunpack.c.l.b16 %v858
  %v1530 = vunpack.c.h.b16 %v858
  %v1531 = vunpack.c.l.b16 %v859
  %v1532 = vunpack.c.l.b16 %v860
  %v1533 = vunpack.c.h.b16 %v860
  %v1534 = vunpack.c.l.b16 %v861
  %v1535 = vunpack.c.h.b16 %v861
  %v1536 = vunpack.c.l.b16 %v862
  %v1537 = vunpack.c.h.b16 %v862
  %v1538 = vunpack.c.l.b16 %v863
  %v1539 = vunpack.c.l.b16 %v864
  %v1540 = vunpack.c.h.b16 %v864
  %v1541 = vunpack.c.l.b16 %v865
  %v1542 = vunpack.c.h.b16 %v865
  %v1543 = vunpack.c.l.b16 %v866
  %v1544 = vunpack.c.h.b16 %v866
  %v1545 = vunpack.c.l.b16 %v867
  %v1546 = vunpack.c.l.b16 %v868
  %v1547 = vunpack.c.h.b16 %v868
  %v1548 = vunpack.c.l.b16 %v869
  %v1549 = vunpack.c.h.b16 %v869
  %v1550 = vunpack.c.l.b16 %v870
  %v1551 = vunpack.c.h.b16 %v870
  %v1552 = vunpack.c.l.b16 %v871
  %v1553 = vunpack.c.l.b16 %v872
  %v1554 = vunpack.c.h.b16 %v872
  %v1555 = vunpack.c.l.b16 %v873
  %v1556 = vunpack.c.h.b16 %v873
  %v1557 = vunpack.c.l.b16 %v874
  %v1558 = vunpack.c.h.b16 %v874
  %v1559 = vunpack.c.l.b16 %v875
  %v1560 = vunpack.c.l.b16 %v876
  %v1561 = vunpack.c.h.b16 %v876
  %v1562 = vunpack.c.l.b16 %v877
  %v1563 = vunpack.c.h.b16 %v877
  %v1564 = vunpack.c.l.b16 %v878
  %v1565 = vunpack.c.h.b16 %v878
  %v1566 = vunpack.c.l.b16 %v879
  %v1567 = vunpack.c.l.b16 %v880
  %v1568 = vunpack.c.h.b16 %v880
  %v1569 = vunpack.c.l.b16 %v881
  %v1570 = vunpack.c.h.b16 %v881
  %v1571 = vunpack.c.l.b16 %v882
  %v1572 = vunpack.c.h.b16 %v882
  %v1573 = vunpack.c.l.b16 %v883
  %v1574 = vunpack.c.l.b16 %v884
  %v1575 = vunpack.c.h.b16 %v884
  %v1576 = vunpack.c.l.b16 %v885
  %v1577 = vunpack.c.h.b16 %v885
  %v1578 = vunpack.c.l.b16 %v886
  %v1579 = vunpack.c.h.b16 %v886
  %v1580 = vunpack.c.l.b16 %v887
  %v1581 = vunpack.c.l.b16 %v888
  %v1582 = vunpack.c.h.b16 %v888
  %v1583 = vunpack.c.l.b16 %v889
  %v1584 = vunpack.c.h.b16 %v889
  %v1585 = vunpack.c.l.b16 %v890
  %v1586 = vunpack.c.h.b16 %v890
  %v1587 = vunpack.c.l.b16 %v891
  %v1588 = vunpack.c.l.b16 %v892
  %v1589 = vunpack.c.h.b16 %v892
  %v1590 = vunpack.c.l.b16 %v893
  %v1591 = vunpack.c.h.b16 %v893
  %v1592 = vunpack.c.l.b16 %v894
  %v1593 = vunpack.c.h.b16 %v894
  %v1594 = vunpack.c.l.b16 %v895
  %v1595 = vunpack.c.l.b16 %v896
  %v1596 = vunpack.c.h.b16 %v896
  %v1597 = vunpack.c.l.b16 %v897
  %v1598 = vunpack.c.h.b16 %v897
  %v1599 = vunpack.c.l.b16 %v898
  %v1600 = vunpack.c.h.b16 %v898
  %v1601 = vunpack.c.l.b16 %v899
  %v1602 = vunpack.c.l.b16 %v900
  %v1603 = vunpack.c.h.b16 %v900
  %v1604 = vunpack.c.l.b16 %v901
  %v1605 = vunpack.c.h.b16 %v901
  %v1606 = vunpack.c.l.b16 %v902
  %v1607 = vunpack.c.h.b16 %v902
  %v1608 = vunpack.c.l.b16 %v903
  %v1609 = vunpack.c.l.b16 %v904
  %v1610 = vunpack.c.h.b16 %v904
  %v1611 = vunpack.c.l.b16 %v905
  %v1612 = vunpack.c.h.b16 %v905
  %v1613 = vunpack.c.l.b16 %v906
  %v1614 = vunpack.c.h.b16 %v906
  %v1615 = vunpack.c.l.b16 %v907
  %v1616 = vunpack.c.l.b16 %v908
  %v1617 = vunpack.c.h.b16 %v908
  %v1618 = vunpack.c.l.b16 %v909
  %v1619 = vunpack.c.h.b16 %v909
  %v1620 = vunpack.c.l.b16 %v910
  %v1621 = vunpack.c.h.b16 %v910
  %v1622 = vunpack.c.l.b16 %v911
  %v1623 = vunpack.c.l.b16 %v912
  %v1624 = vunpack.c.h.b16 %v912
  %v1625 = vunpack.c.l.b16 %v913
  %v1626 = vunpack.c.h.b16 %v913
  %v1627 = vunpack.c.l.b16 %v914
  %v1628 = vunpack.c.h.b16 %v914
  %v1629 = vunpack.c.l.b16 %v915
  %v1630 = vunpack.c.l.b16 %v916
  %v1631 = vunpack.c.h.b16 %v916
  %v1632 = vunpack.c.l.b16 %v917
  %v1633 = vunpack.c.h.b16 %v917
  %v1634 = vunpack.c.l.b16 %v918
  %v1635 = vunpack.c.h.b16 %v918
  %v1636 = vunpack.c.l.b16 %v919
  %v1637 = vunpack.c.l.b16 %v920
  %v1638 = vunpack.c.h.b16 %v920
  %v1639 = vunpack.c.l.b16 %v921
  %v1640 = vunpack.c.h.b16 %v921
  %v1641 = vunpack.c.l.b16 %v922
  %v1642 = vunpack.c.h.b16 %v922
  %v1643 = vunpack.c.l.b16 %v923
  %v1644 = vunpack.c.l.b16 %v924
  %v1645 = vunpack.c.h.b16 %v924
  %v1646 = vunpack.c.l.b16 %v925
  %v1647 = vunpack.c.h.b16 %v925
  %v1648 = vunpack.c.l.b16 %v926
  %v1649 = vunpack.c.h.b16 %v926
  %v1650 = vunpack.c.l.b16 %v927
  %v1651 = vunpack.c.l.b16 %v928
  %v1652 = vunpack.c.h.b16 %v928
  %v1653 = vunpack.c.l.b16 %v929
  %v1654 = vunpack.c.h.b16 %v929
  %v1655 = vunpack.c.l.b16 %v930
  %v1656 = vunpack.c.h.b16 %v930
  %v1657 = vunpack.c.l.b16 %v931
  %v1658 = vunpack.c.l.b16 %v932
  %v1659 = vunpack.c.h.b16 %v932
  %v1660 = vunpack.c.l.b16 %v933
  %v1661 = vunpack.c.h.b16 %v933
  %v1662 = vunpack.c.l.b16 %v934
  %v1663 = vunpack.c.h.b16 %v934
  %v1664 = vunpack.c.l.b16 %v935
  %v1665 = vunpack.c.l.b16 %v936
  %v1666 = vunpack.c.h.b16 %v936
  %v1667 = vunpack.c.l.b16 %v937
  %v1668 = vunpack.c.h.b16 %v937
  %v1669 = vunpack.c.l.b16 %v938
  %v1670 = vunpack.c.h.b16 %v938
  %v1671 = vunpack.c.l.b16 %v939
  %v1672 = vunpack.c.l.b16 %v940
  %v1673 = vunpack.c.h.b16 %v940
  %v1674 = vunpack.c.l.b16 %v941
  %v1675 = vunpack.c.h.b16 %v941
  %v1676 = vunpack.c.l.b16 %v942
  %v1677 = vunpack.c.h.b16 %v942
  %v1678 = vunpack.c.l.b16 %v943
  %v1679 = vunpack.c.l.b16 %v944
  %v1680 = vunpack.c.h.b16 %v944
  %v1681 = vunpack.c.l.b16 %v945
  %v1682 = vunpack.c.h.b16 %v945
  %v1683 = vunpack.c.l.b16 %v946
  %v1684 = vunpack.c.h.b16 %v946
  %v1685 = vunpack.c.l.b16 %v947
  %v1686 = vunpack.c.l.b16 %v948
  %v1687 = vunpack.c.h.b16 %v948
  %v1688 = vunpack.c.l.b16 %v949
  %v1689 = vunpack.c.h.b16 %v949
  %v1690 = vunpack.c.l.b16 %v950
  %v1691 = vunpack.c.h.b16 %v950
  %v1692 = vunpack.c.l.b16 %v951
  %v1693 = vpack.c.b16 %v1252, %v1245
  %v1694 = vpack.c.b16 %v1253, %v1246
  %v1695 = vpack.c.b16 %v1254, %v1247
  %v1696 = vpack.c.b16 %v1255, %v1248
  %v1697 = vpack.c.b16 %v1256, %v1249
  %v1698 = vpack.c.b16 %v1257, %v1250
  %v1699 = vpack.c.b16 %v1258, %v1251
  %v1700 = vpack.c.b16 %v1266, %v1259
  %v1701 = vpack.c.b16 %v1267, %v1260
  %v1702 = vpack.c.b16 %v1268, %v1261
  %v1703 = vpack.c.b16 %v1269, %v1262
  %v1704 = vpack.c.b16 %v1270, %v1263
  %v1705 = vpack.c.b16 %v1271, %v1264
  %v1706 = vpack.c.b16 %v1272, %v1265
  %v1707 = vpack.c.b16 %v1280, %v1273
  %v1708 = vpack.c.b16 %v1281, %v1274
  %v1709 = vpack.c.b16 %v1282, %v1275
  %v1710 = vpack.c.b16 %v1283, %v1276
  %v1711 = vpack.c.b16 %v1284, %v1277
  %v1712 = vpack.c.b16 %v1285, %v1278
  %v1713 = vpack.c.b16 %v1286, %v1279
  %v1714 = vpack.c.b16 %v1294, %v1287
  %v1715 = vpack.c.b16 %v1295, %v1288
  %v1716 = vpack.c.b16 %v1296, %v1289
  %v1717 = vpack.c.b16 %v1297, %v1290
  %v1718 = vpack.c.b16 %v1298, %v1291
  %v1719 = vpack.c.b16 %v1299, %v1292
  %v1720 = vpack.c.b16 %v1300, %v1293
  %v1721 = vpack.c.b16 %v1308, %v1301
  %v1722 = vpack.c.b16 %v1309, %v1302
  %v1723 = vpack.c.b16 %v1310, %v1303
  %v1724 = vpack.c.b16 %v1311, %v1304
  %v1725 = vpack.c.b16 %v1312, %v1305
  %v1726 = vpack.c.b16 %v1313, %v1306
  %v1727 = vpack.c.b16 %v1314, %v1307
  %v1728 = vpack.c.b16 %v1322, %v1315
  %v1729 = vpack.c.b16 %v1323, %v1316
  %v1730 = vpack.c.b16 %v1324, %v1317
  %v1731 = vpack.c.b16 %v1325, %v1318
  %v1732 = vpack.c.b16 %v1326, %v1319
  %v1733 = vpack.c.b16 %v1327, %v1320
  %v1734 = vpack.c.b16 %v1328, %v1321
  %v1735 = vpack.c.b16 %v1336, %v1329
  %v1736 = vpack.c.b16 %v1337, %v1330
  %v1737 = vpack.c.b16 %v1338, %v1331
  %v1738 = vpack.c.b16 %v1339, %v1332
  %v1739 = vpack.c.b16 %v1340, %v1333
  %v1740 = vpack.c.b16 %v1341, %v1334
  %v1741 = vpack.c.b16 %v1342, %v1335
  %v1742 = vpack.c.b16 %v1350, %v1343
  %v1743 = vpack.c.b16 %v1351, %v1344
  %v1744 = vpack.c.b16 %v1352, %v1345
  %v1745 = vpack.c.b16 %v1353, %v1346
  %v1746 = vpack.c.b16 %v1354, %v1347
  %v1747 = vpack.c.b16 %v1355, %v1348
  %v1748 = vpack.c.b16 %v1356, %v1349
  %v1749 = vpack.c.b16 %v1364, %v1357
  %v1750 = vpack.c.b16 %v1365, %v1358
  %v1751 = vpack.c.b16 %v1366, %v1359
  %v1752 = vpack.c.b16 %v1367, %v1360
  %v1753 = vpack.c.b16 %v1368, %v1361
  %v1754 = vpack.c.b16 %v1369, %v1362
  %v1755 = vpack.c.b16 %v1370, %v1363
  %v1756 = vpack.c.b16 %v1378, %v1371
  %v1757 = vpack.c.b16 %v1379, %v1372
  %v1758 = vpack.c.b16 %v1380, %v1373
  %v1759 = vpack.c.b16 %v1381, %v1374
  %v1760 = vpack.c.b16 %v1382, %v1375
  %v1761 = vpack.c.b16 %v1383, %v1376
  %v1762 = vpack.c.b16 %v1384, %v1377
  %v1763 = vpack.c.b16 %v1392, %v1385
  %v1764 = vpack.c.b16 %v1393, %v1386
  %v1765 = vpack.c.b16 %v1394, %v1387
  %v1766 = vpack.c.b16 %v1395, %v1388
  %v1767 = vpack.c.b16 %v1396, %v1389
  %v1768 = vpack.c.b16 %v1397, %v1390
  %v1769 = vpack.c.b16 %v1398, %v1391
  %v1770 = vpack.c.b16 %v1406, %v1399
  %v1771 = vpack.c.b16 %v1407, %v1400
  %v1772 = vpack.c.b16 %v1408, %v1401
  %v1773 = vpack.c.b16 %v1409, %v1402
  %v1774 = vpack.c.b16 %v1410, %v1403
  %v1775 = vpack.c.b16 %v1411, %v1404
  %v1776 = vpack.c.b16 %v1412, %v1405
  %v1777 = vpack.c.b16 %v1420, %v1413
  %v1778 = vpack.c.b16 %v1421, %v1414
  %v1779 = vpack.c.b16 %v1422, %v1415
  %v1780 = vpack.c.b16 %v1423, %v1416
  %v1781 = vpack.c.b16 %v1424, %v1417
  %v1782 = vpack.c.b16 %v1425, %v1418
  %v1783 = vpack.c.b16 %v1426, %v1419
  %v1784 = vpack.c.b16 %v1434, %v1427
  %v1785 = vpack.c.b16 %v1435, %v1428
  %v1786 = vpack.c.b16 %v1436, %v1429
  %v1787 = vpack.c.b16 %v1437, %v1430
  %v1788 = vpack.c.b16 %v1438, %v1431
  %v1789 = vpack.c.b16 %v1439, %v1432
  %v1790 = vpack.c.b16 %v1440, %v1433
  %v1791 = vpack.c.b16 %v1448, %v1441
  %v1792 = vpack.c.b16 %v1449, %v1442
  %v1793 = vpack.c.b16 %v1450, %v1443
  %v1794 = vpack.c.b16 %v1451, %v1444
  %v1795 = vpack.c.b16 %v1452, %v1445
  %v1796 = vpack.c.b16 %v1453, %v1446
  %v1797 = vpack.c.b16 %v1454, %v1447
  %v1798 = vpack.c.b16 %v1462, %v1455
  %v1799 = vpack.c.b16 %v1463, %v1456
  %v1800 = vpack.c.b16 %v1464, %v1457
  %v1801 = vpack.c.b16 %v1465, %v1458
  %v1802 = vpack.c.b16 %v1466, %v1459
  %v1803 = vpack.c.b16 %v1467, %v1460
  %v1804 = vpack.c.b16 %v1468, %v1461
  %v1805 = vpack.c.b16 %v1476, %v1469
  %v1806 = vpack.c.b16 %v1477, %v1470
  %v1807 = vpack.c.b16 %v1478, %v1471
  %v1808 = vpack.c.b16 %v1479, %v1472
  %v1809 = vpack.c.b16 %v1480, %v1473
  %v1810 = vpack.c.b16 %v1481, %v1474
  %v1811 = vpack.c.b16 %v1482, %v1475
  %v1812 = vpack.c.b16 %v1490, %v1483
  %v1813 = vpack.c.b16 %v1491, %v1484
  %v1814 = vpack.c.b16 %v1492, %v1485
  %v1815 = vpack.c.b16 %v1493, %v1486
  %v1816 = vpack.c.b16 %v1494, %v1487
  %v1817 = vpack.c.b16 %v1495, %v1488
  %v1818 = vpack.c.b16 %v1496, %v1489
  %v1819 = vpack.c.b16 %v1504, %v1497
  %v1820 = vpack.c.b16 %v1505, %v1498
  %v1821 = vpack.c.b16 %v1506, %v1499
  %v1822 = vpack.c.b16 %v1507, %v1500
  %v1823 = vpack.c.b16 %v1508, %v1501
  %v1824 = vpack.c.b16 %v1509, %v1502
  %v1825 = vpack.c.b16 %v1510, %v1503
  %v1826 = vpack.c.b16 %v1518, %v1511
  %v1827 = vpack.c.b16 %v1519, %v1512
  %v1828 = vpack.c.b16 %v1520, %v1513
  %v1829 = vpack.c.b16 %v1521, %v1514
  %v1830 = vpack.c.b16 %v1522, %v1515
  %v1831 = vpack.c.b16 %v1523, %v1516
  %v1832 = vpack.c.b16 %v1524, %v1517
  %v1833 = vpack.c.b16 %v1532, %v1525
  %v1834 = vpack.c.b16 %v1533, %v1526
  %v1835 = vpack.c.b16 %v1534, %v1527
  %v1836 = vpack.c.b16 %v1535, %v1528
  %v1837 = vpack.c.b16 %v1536, %v1529
  %v1838 = vpack.c.b16 %v1537, %v1530
  %v1839 = vpack.c.b16 %v1538, %v1531
  %v1840 = vpack.c.b16 %v1546, %v1539
  %v1841 = vpack.c.b16 %v1547, %v1540
  %v1842 = vpack.c.b16 %v1548, %v1541
  %v1843 = vpack.c.b16 %v1549, %v1542
  %v1844 = vpack.c.b16 %v1550, %v1543
  %v1845 = vpack.c.b16 %v1551, %v1544
  %v1846 = vpack.c.b16 %v1552, %v1545
  %v1847 = vpack.c.b16 %v1560, %v1553
  %v1848 = vpack.c.b16 %v1561, %v1554
  %v1849 = vpack.c.b16 %v1562, %v1555
  %v1850 = vpack.c.b16 %v1563, %v1556
  %v1851 = vpack.c.b16 %v1564, %v1557
  %v1852 = vpack.c.b16 %v1565, %v1558
  %v1853 = vpack.c.b16 %v1566, %v1559
  %v1854 = vpack.c.b16 %v1574, %v1567
  %v1855 = vpack.c.b16 %v1575, %v1568
  %v1856 = vpack.c.b16 %v1576, %v1569
  %v1857 = vpack.c.b16 %v1577, %v1570
  %v1858 = vpack.c.b16 %v1578, %v1571
  %v1859 = vpack.c.b16 %v1579, %v1572
  %v1860 = vpack.c.b16 %v1580, %v1573
  %v1861 = vpack.c.b16 %v1588, %v1581
  %v1862 = vpack.c.b16 %v1589, %v1582
  %v1863 = vpack.c.b16 %v1590, %v1583
  %v1864 = vpack.c.b16 %v1591, %v1584
  %v1865 = vpack.c.b16 %v1592, %v1585
  %v1866 = vpack.c.b16 %v1593, %v1586
  %v1867 = vpack.c.b16 %v1594, %v1587
  %v1868 = vpack.c.b16 %v1602, %v1595
  %v1869 = vpack.c.b16 %v1603, %v1596
  %v1870 = vpack.c.b16 %v1604, %v1597
  %v1871 = vpack.c.b16 %v1605, %v1598
  %v1872 = vpack.c.b16 %v1606, %v1599
  %v1873 = vpack.c.b16 %v1607, %v1600
  %v1874 = vpack.c.b16 %v1608, %v1601
  %v1875 = vpack.c.b16 %v1616, %v1609
  %v1876 = vpack.c.b16 %v1617, %v1610
  %v1877 = vpack.c.b16 %v1618, %v1611
  %v1878 = vpack.c.b16 %v1619, %v1612
  %v1879 = vpack.c.b16 %v1620, %v1613
  %v1880 = vpack.c.b16 %v1621, %v1614
  %v1881 = vpack.c.b16 %v1622, %v1615
  %v1882 = vpack.c.b16 %v1630, %v1623
  %v1883 = vpack.c.b16 %v1631, %v1624
  %v1884 = vpack.c.b16 %v1632, %v1625
  %v1885 = vpack.c.b16 %v1633, %v1626
  %v1886 = vpack.c.b16 %v1634, %v1627
  %v1887 = vpack.c.b16 %v1635, %v1628
  %v1888 = vpack.c.b16 %v1636, %v1629
  %v1889 = vpack.c.b16 %v1644, %v1637
  %v1890 = vpack.c.b16 %v1645, %v1638
  %v1891 = vpack.c.b16 %v1646, %v1639
  %v1892 = vpack.c.b16 %v1647, %v1640
  %v1893 = vpack.c.b16 %v1648, %v1641
  %v1894 = vpack.c.b16 %v1649, %v1642
  %v1895 = vpack.c.b16 %v1650, %v1643
  %v1896 = vpack.c.b16 %v1658, %v1651
  %v1897 = vpack.c.b16 %v1659, %v1652
  %v1898 = vpack.c.b16 %v1660, %v1653
  %v1899 = vpack.c.b16 %v1661, %v1654
  %v1900 = vpack.c.b16 %v1662, %v1655
  %v1901 = vpack.c.b16 %v1663, %v1656
  %v1902 = vpack.c.b16 %v1664, %v1657
  %v1903 = vpack.c.b16 %v1672, %v1665
  %v1904 = vpack.c.b16 %v1673, %v1666
  %v1905 = vpack.c.b16 %v1674, %v1667
  %v1906 = vpack.c.b16 %v1675, %v1668
  %v1907 = vpack.c.b16 %v1676, %v1669
  %v1908 = vpack.c.b16 %v1677, %v1670
  %v1909 = vpack.c.b16 %v1678, %v1671
  %v1910 = vpack.c.b16 %v1686, %v1679
  %v1911 = vpack.c.b16 %v1687, %v1680
  %v1912 = vpack.c.b16 %v1688, %v1681
  %v1913 = vpack.c.b16 %v1689, %v1682
  %v1914 = vpack.c.b16 %v1690, %v1683
  %v1915 = vpack.c.b16 %v1691, %v1684
  %v1916 = vpack.c.b16 %v1692, %v1685
  %2141 = vmatprep.subr.bf16.mxu0 %v1694
  %2142 = vmatpush1.bf16.msra.mxu0 %v1693
  %2143 = vmatprep.subr.bf16.mxu0 %v1701
  %2144 = vmatpush1.bf16.msra.mxu0 %v1700
  %2145 = vmatprep.subr.bf16.mxu0 %v1708
  %2146 = vmatpush1.bf16.msra.mxu0 %v1707
  %2147 = vmatprep.subr.bf16.mxu0 %v1715
  %2148 = vmatpush1.bf16.msra.mxu0 %v1714
  %2149 = vmatprep.subr.bf16.mxu0 %v1722
  %2150 = vmatpush1.bf16.msra.mxu0 %v1721
  %2151 = vmatprep.subr.bf16.mxu0 %v1729
  %2152 = vmatpush1.bf16.msra.mxu0 %v1728
  %2153 = vmatprep.subr.bf16.mxu0 %v1736
  %2154 = vmatpush1.bf16.msra.mxu0 %v1735
  %2155 = vmatprep.subr.bf16.mxu0 %v1743
  %2156 = vmatpush1.bf16.msra.mxu0 %v1742
  %2157 = vmatprep.subr.bf16.mxu0 %v1750
  %2158 = vmatpush1.bf16.msra.mxu0 %v1749
  %2159 = vmatprep.subr.bf16.mxu0 %v1757
  %2160 = vmatpush1.bf16.msra.mxu0 %v1756
  %2161 = vmatprep.subr.bf16.mxu0 %v1764
  %2162 = vmatpush1.bf16.msra.mxu0 %v1763
  %2163 = vmatprep.subr.bf16.mxu0 %v1771
  %2164 = vmatpush1.bf16.msra.mxu0 %v1770
  %2165 = vmatprep.subr.bf16.mxu0 %v1778
  %2166 = vmatpush1.bf16.msra.mxu0 %v1777
  %2167 = vmatprep.subr.bf16.mxu0 %v1785
  %2168 = vmatpush1.bf16.msra.mxu0 %v1784
  %2169 = vmatprep.subr.bf16.mxu0 %v1792
  %2170 = vmatpush1.bf16.msra.mxu0 %v1791
  %2171 = vmatprep.subr.bf16.mxu0 %v1799
  %2172 = vmatpush1.bf16.msra.mxu0 %v1798
  %2173 = vmatprep.mubr.bf16.mxu0 %v693
  %2174 = vmatmul.mubr.bf16.gmra.mrb[0].mxu0 %v692
  %v2175 = vpop.f32.mrb[0].mxu0
  %v2176 = vadd.f32 %v957, %v2175
  %v2177 = vpop.f32.mrb[0].mxu0
  %v2178 = vadd.f32 %v961, %v2177
  %v2179 = vpop.f32.mrb[0].mxu0
  %v2180 = vadd.f32 %v957, %v2179
  %v2181 = vpop.f32.mrb[0].mxu0
  %v2182 = vadd.f32 %v961, %v2181
  %2183 = vdwg.mxu0
  %2184 = vmatprep.subr.bf16.mxu0 %v1806
  %2185 = vmatpush1.bf16.msra.mxu0 %v1805
  %2186 = vmatprep.subr.bf16.mxu0 %v1813
  %2187 = vmatpush1.bf16.msra.mxu0 %v1812
  %2188 = vmatprep.subr.bf16.mxu0 %v1820
  %2189 = vmatpush1.bf16.msra.mxu0 %v1819
  %2190 = vmatprep.subr.bf16.mxu0 %v1827
  %2191 = vmatpush1.bf16.msra.mxu0 %v1826
  %2192 = vmatprep.subr.bf16.mxu0 %v1834
  %2193 = vmatpush1.bf16.msra.mxu0 %v1833
  %2194 = vmatprep.subr.bf16.mxu0 %v1841
  %2195 = vmatpush1.bf16.msra.mxu0 %v1840
  %2196 = vmatprep.subr.bf16.mxu0 %v1848
  %2197 = vmatpush1.bf16.msra.mxu0 %v1847
  %2198 = vmatprep.subr.bf16.mxu0 %v1855
  %2199 = vmatpush1.bf16.msra.mxu0 %v1854
  %2200 = vmatprep.subr.bf16.mxu0 %v1862
  %2201 = vmatpush1.bf16.msra.mxu0 %v1861
  %2202 = vmatprep.subr.bf16.mxu0 %v1869
  %2203 = vmatpush1.bf16.msra.mxu0 %v1868
  %2204 = vmatprep.subr.bf16.mxu0 %v1876
  %2205 = vmatpush1.bf16.msra.mxu0 %v1875
  %2206 = vmatprep.subr.bf16.mxu0 %v1883
  %2207 = vmatpush1.bf16.msra.mxu0 %v1882
  %2208 = vmatprep.subr.bf16.mxu0 %v1890
  %2209 = vmatpush1.bf16.msra.mxu0 %v1889
  %2210 = vmatprep.subr.bf16.mxu0 %v1897
  %2211 = vmatpush1.bf16.msra.mxu0 %v1896
  %2212 = vmatprep.subr.bf16.mxu0 %v1904
  %2213 = vmatpush1.bf16.msra.mxu0 %v1903
  %2214 = vmatprep.subr.bf16.mxu0 %v1911
  %2215 = vmatpush1.bf16.msra.mxu0 %v1910
  %2216 = vmatprep.mubr.bf16.mxu0 %v695
  %2217 = vmatmul.mubr.bf16.gmra.mrb[0].mxu0 %v694
  %v2218 = vpop.f32.mrb[0].mxu0
  %v2219 = vadd.f32 %v2176, %v2218
  %v2220 = vpop.f32.mrb[0].mxu0
  %v2221 = vadd.f32 %v2178, %v2220
  %v2222 = vpop.f32.mrb[0].mxu0
  %v2223 = vadd.f32 %v2180, %v2222
  %v2224 = vpop.f32.mrb[0].mxu0
  %v2225 = vadd.f32 %v2182, %v2224
  %2226 = vdwg.mxu0
  %2227 = vmatprep.subr.bf16.mxu0 %v1696
  %2228 = vmatpush1.bf16.msra.mxu0 %v1695
  %2229 = vmatprep.subr.bf16.mxu0 %v1703
  %2230 = vmatpush1.bf16.msra.mxu0 %v1702
  %2231 = vmatprep.subr.bf16.mxu0 %v1710
  %2232 = vmatpush1.bf16.msra.mxu0 %v1709
  %2233 = vmatprep.subr.bf16.mxu0 %v1717
  %2234 = vmatpush1.bf16.msra.mxu0 %v1716
  %2235 = vmatprep.subr.bf16.mxu0 %v1724
  %2236 = vmatpush1.bf16.msra.mxu0 %v1723
  %2237 = vmatprep.subr.bf16.mxu0 %v1731
  %2238 = vmatpush1.bf16.msra.mxu0 %v1730
  %2239 = vmatprep.subr.bf16.mxu0 %v1738
  %2240 = vmatpush1.bf16.msra.mxu0 %v1737
  %2241 = vmatprep.subr.bf16.mxu0 %v1745
  %2242 = vmatpush1.bf16.msra.mxu0 %v1744
  %2243 = vmatprep.subr.bf16.mxu0 %v1752
  %2244 = vmatpush1.bf16.msra.mxu0 %v1751
  %2245 = vmatprep.subr.bf16.mxu0 %v1759
  %2246 = vmatpush1.bf16.msra.mxu0 %v1758
  %2247 = vmatprep.subr.bf16.mxu0 %v1766
  %2248 = vmatpush1.bf16.msra.mxu0 %v1765
  %2249 = vmatprep.subr.bf16.mxu0 %v1773
  %2250 = vmatpush1.bf16.msra.mxu0 %v1772
  %2251 = vmatprep.subr.bf16.mxu0 %v1780
  %2252 = vmatpush1.bf16.msra.mxu0 %v1779
  %2253 = vmatprep.subr.bf16.mxu0 %v1787
  %2254 = vmatpush1.bf16.msra.mxu0 %v1786
  %2255 = vmatprep.subr.bf16.mxu0 %v1794
  %2256 = vmatpush1.bf16.msra.mxu0 %v1793
  %2257 = vmatprep.subr.bf16.mxu0 %v1801
  %2258 = vmatpush1.bf16.msra.mxu0 %v1800
  %2259 = vmatprep.mubr.bf16.mxu0 %v693
  %2260 = vmatmul.mubr.bf16.gmra.mrb[0].mxu0 %v692
  %v2261 = vpop.f32.mrb[0].mxu0
  %v2262 = vadd.f32 %v965, %v2261
  %v2263 = vpop.f32.mrb[0].mxu0
  %v2264 = vadd.f32 %v969, %v2263
  %v2265 = vpop.f32.mrb[0].mxu0
  %v2266 = vadd.f32 %v965, %v2265
  %v2267 = vpop.f32.mrb[0].mxu0
  %v2268 = vadd.f32 %v969, %v2267
  %2269 = vdwg.mxu0
  %2270 = vmatprep.subr.bf16.mxu0 %v1808
  %2271 = vmatpush1.bf16.msra.mxu0 %v1807
  %2272 = vmatprep.subr.bf16.mxu0 %v1815
  %2273 = vmatpush1.bf16.msra.mxu0 %v1814
  %2274 = vmatprep.subr.bf16.mxu0 %v1822
  %2275 = vmatpush1.bf16.msra.mxu0 %v1821
  %2276 = vmatprep.subr.bf16.mxu0 %v1829
  %2277 = vmatpush1.bf16.msra.mxu0 %v1828
  %2278 = vmatprep.subr.bf16.mxu0 %v1836
  %2279 = vmatpush1.bf16.msra.mxu0 %v1835
  %2280 = vmatprep.subr.bf16.mxu0 %v1843
  %2281 = vmatpush1.bf16.msra.mxu0 %v1842
  %2282 = vmatprep.subr.bf16.mxu0 %v1850
  %2283 = vmatpush1.bf16.msra.mxu0 %v1849
  %2284 = vmatprep.subr.bf16.mxu0 %v1857
  %2285 = vmatpush1.bf16.msra.mxu0 %v1856
  %2286 = vmatprep.subr.bf16.mxu0 %v1864
  %2287 = vmatpush1.bf16.msra.mxu0 %v1863
  %2288 = vmatprep.subr.bf16.mxu0 %v1871
  %2289 = vmatpush1.bf16.msra.mxu0 %v1870
  %2290 = vmatprep.subr.bf16.mxu0 %v1878
  %2291 = vmatpush1.bf16.msra.mxu0 %v1877
  %2292 = vmatprep.subr.bf16.mxu0 %v1885
  %2293 = vmatpush1.bf16.msra.mxu0 %v1884
  %2294 = vmatprep.subr.bf16.mxu0 %v1892
  %2295 = vmatpush1.bf16.msra.mxu0 %v1891
  %2296 = vmatprep.subr.bf16.mxu0 %v1899
  %2297 = vmatpush1.bf16.msra.mxu0 %v1898
  %2298 = vmatprep.subr.bf16.mxu0 %v1906
  %2299 = vmatpush1.bf16.msra.mxu0 %v1905
  %2300 = vmatprep.subr.bf16.mxu0 %v1913
  %2301 = vmatpush1.bf16.msra.mxu0 %v1912
  %2302 = vmatprep.mubr.bf16.mxu0 %v695
  %2303 = vmatmul.mubr.bf16.gmra.mrb[0].mxu0 %v694
  %v2304 = vpop.f32.mrb[0].mxu0
  %v2305 = vadd.f32 %v2262, %v2304
  %v2306 = vpop.f32.mrb[0].mxu0
  %v2307 = vadd.f32 %v2264, %v2306
  %v2308 = vpop.f32.mrb[0].mxu0
  %v2309 = vadd.f32 %v2266, %v2308
  %v2310 = vpop.f32.mrb[0].mxu0
  %v2311 = vadd.f32 %v2268, %v2310
  %2312 = vdwg.mxu0
  %2313 = vmatprep.subr.bf16.mxu0 %v1698
  %2314 = vmatpush1.bf16.msra.mxu0 %v1697
  %2315 = vmatprep.subr.bf16.mxu0 %v1705
  %2316 = vmatpush1.bf16.msra.mxu0 %v1704
  %2317 = vmatprep.subr.bf16.mxu0 %v1712
  %2318 = vmatpush1.bf16.msra.mxu0 %v1711
  %2319 = vmatprep.subr.bf16.mxu0 %v1719
  %2320 = vmatpush1.bf16.msra.mxu0 %v1718
  %2321 = vmatprep.subr.bf16.mxu0 %v1726
  %2322 = vmatpush1.bf16.msra.mxu0 %v1725
  %2323 = vmatprep.subr.bf16.mxu0 %v1733
  %2324 = vmatpush1.bf16.msra.mxu0 %v1732
  %2325 = vmatprep.subr.bf16.mxu0 %v1740
  %2326 = vmatpush1.bf16.msra.mxu0 %v1739
  %2327 = vmatprep.subr.bf16.mxu0 %v1747
  %2328 = vmatpush1.bf16.msra.mxu0 %v1746
  %2329 = vmatprep.subr.bf16.mxu0 %v1754
  %2330 = vmatpush1.bf16.msra.mxu0 %v1753
  %2331 = vmatprep.subr.bf16.mxu0 %v1761
  %2332 = vmatpush1.bf16.msra.mxu0 %v1760
  %2333 = vmatprep.subr.bf16.mxu0 %v1768
  %2334 = vmatpush1.bf16.msra.mxu0 %v1767
  %2335 = vmatprep.subr.bf16.mxu0 %v1775
  %2336 = vmatpush1.bf16.msra.mxu0 %v1774
  %2337 = vmatprep.subr.bf16.mxu0 %v1782
  %2338 = vmatpush1.bf16.msra.mxu0 %v1781
  %2339 = vmatprep.subr.bf16.mxu0 %v1789
  %2340 = vmatpush1.bf16.msra.mxu0 %v1788
  %2341 = vmatprep.subr.bf16.mxu0 %v1796
  %2342 = vmatpush1.bf16.msra.mxu0 %v1795
  %2343 = vmatprep.subr.bf16.mxu0 %v1803
  %2344 = vmatpush1.bf16.msra.mxu0 %v1802
  %2345 = vmatprep.mubr.bf16.mxu0 %v693
  %2346 = vmatmul.mubr.bf16.gmra.mrb[0].mxu0 %v692
  %v2347 = vpop.f32.mrb[0].mxu0
  %v2348 = vadd.f32 %v973, %v2347
  %v2349 = vpop.f32.mrb[0].mxu0
  %v2350 = vadd.f32 %v977, %v2349
  %v2351 = vpop.f32.mrb[0].mxu0
  %v2352 = vadd.f32 %v973, %v2351
  %v2353 = vpop.f32.mrb[0].mxu0
  %v2354 = vadd.f32 %v977, %v2353
  %2355 = vdwg.mxu0
  %2356 = vmatprep.subr.bf16.mxu0 %v1810
  %2357 = vmatpush1.bf16.msra.mxu0 %v1809
  %2358 = vmatprep.subr.bf16.mxu0 %v1817
  %2359 = vmatpush1.bf16.msra.mxu0 %v1816
  %2360 = vmatprep.subr.bf16.mxu0 %v1824
  %2361 = vmatpush1.bf16.msra.mxu0 %v1823
  %2362 = vmatprep.subr.bf16.mxu0 %v1831
  %2363 = vmatpush1.bf16.msra.mxu0 %v1830
  %2364 = vmatprep.subr.bf16.mxu0 %v1838
  %2365 = vmatpush1.bf16.msra.mxu0 %v1837
  %2366 = vmatprep.subr.bf16.mxu0 %v1845
  %2367 = vmatpush1.bf16.msra.mxu0 %v1844
  %2368 = vmatprep.subr.bf16.mxu0 %v1852
  %2369 = vmatpush1.bf16.msra.mxu0 %v1851
  %2370 = vmatprep.subr.bf16.mxu0 %v1859
  %2371 = vmatpush1.bf16.msra.mxu0 %v1858
  %2372 = vmatprep.subr.bf16.mxu0 %v1866
  %2373 = vmatpush1.bf16.msra.mxu0 %v1865
  %2374 = vmatprep.subr.bf16.mxu0 %v1873
  %2375 = vmatpush1.bf16.msra.mxu0 %v1872
  %2376 = vmatprep.subr.bf16.mxu0 %v1880
  %2377 = vmatpush1.bf16.msra.mxu0 %v1879
  %2378 = vmatprep.subr.bf16.mxu0 %v1887
  %2379 = vmatpush1.bf16.msra.mxu0 %v1886
  %2380 = vmatprep.subr.bf16.mxu0 %v1894
  %2381 = vmatpush1.bf16.msra.mxu0 %v1893
  %2382 = vmatprep.subr.bf16.mxu0 %v1901
  %2383 = vmatpush1.bf16.msra.mxu0 %v1900
  %2384 = vmatprep.subr.bf16.mxu0 %v1908
  %2385 = vmatpush1.bf16.msra.mxu0 %v1907
  %2386 = vmatprep.subr.bf16.mxu0 %v1915
  %2387 = vmatpush1.bf16.msra.mxu0 %v1914
  %2388 = vmatprep.mubr.bf16.mxu0 %v695
  %2389 = vmatmul.mubr.bf16.gmra.mrb[0].mxu0 %v694
  %v2390 = vpop.f32.mrb[0].mxu0
  %v2391 = vadd.f32 %v2348, %v2390
  %v2392 = vpop.f32.mrb[0].mxu0
  %v2393 = vadd.f32 %v2350, %v2392
  %v2394 = vpop.f32.mrb[0].mxu0
  %v2395 = vadd.f32 %v2352, %v2394
  %v2396 = vpop.f32.mrb[0].mxu0
  %v2397 = vadd.f32 %v2354, %v2396
  %2398 = vdwg.mxu0
  %2399 = vmatprep.subr.bf16.mxu0 0
  %2400 = vmatpush1.bf16.msra.mxu0 %v1699
  %2401 = vmatprep.subr.bf16.mxu0 0
  %2402 = vmatpush1.bf16.msra.mxu0 %v1706
  %2403 = vmatprep.subr.bf16.mxu0 0
  %2404 = vmatpush1.bf16.msra.mxu0 %v1713
  %2405 = vmatprep.subr.bf16.mxu0 0
  %2406 = vmatpush1.bf16.msra.mxu0 %v1720
  %2407 = vmatprep.subr.bf16.mxu0 0
  %2408 = vmatpush1.bf16.msra.mxu0 %v1727
  %2409 = vmatprep.subr.bf16.mxu0 0
  %2410 = vmatpush1.bf16.msra.mxu0 %v1734
  %2411 = vmatprep.subr.bf16.mxu0 0
  %2412 = vmatpush1.bf16.msra.mxu0 %v1741
  %2413 = vmatprep.subr.bf16.mxu0 0
  %2414 = vmatpush1.bf16.msra.mxu0 %v1748
  %2415 = vmatprep.subr.bf16.mxu0 0
  %2416 = vmatpush1.bf16.msra.mxu0 %v1755
  %2417 = vmatprep.subr.bf16.mxu0 0
  %2418 = vmatpush1.bf16.msra.mxu0 %v1762
  %2419 = vmatprep.subr.bf16.mxu0 0
  %2420 = vmatpush1.bf16.msra.mxu0 %v1769
  %2421 = vmatprep.subr.bf16.mxu0 0
  %2422 = vmatpush1.bf16.msra.mxu0 %v1776
  %2423 = vmatprep.subr.bf16.mxu0 0
  %2424 = vmatpush1.bf16.msra.mxu0 %v1783
  %2425 = vmatprep.subr.bf16.mxu0 0
  %2426 = vmatpush1.bf16.msra.mxu0 %v1790
  %2427 = vmatprep.subr.bf16.mxu0 0
  %2428 = vmatpush1.bf16.msra.mxu0 %v1797
  %2429 = vmatprep.subr.bf16.mxu0 0
  %2430 = vmatpush1.bf16.msra.mxu0 %v1804
  %2431 = vmatprep.mubr.bf16.mxu0 %v693
  %2432 = vmatmul.mubr.bf16.gmra.mrb[0].mxu0 %v692
  %v2433 = vpop.f32.mrb[0].mxu0
  %v2434 = vadd.f32 %v981, %v2433
  %v2435 = vpop.f32.mrb[0].mxu0
  %v2436 = vpop.f32.mrb[0].mxu0
  %v2437 = vadd.f32 %v981, %v2436
  %v2438 = vpop.f32.mrb[0].mxu0
  %2439 = vdwg.mxu0
  %2440 = vmatprep.subr.bf16.mxu0 0
  %2441 = vmatpush1.bf16.msra.mxu0 %v1811
  %2442 = vmatprep.subr.bf16.mxu0 0
  %2443 = vmatpush1.bf16.msra.mxu0 %v1818
  %2444 = vmatprep.subr.bf16.mxu0 0
  %2445 = vmatpush1.bf16.msra.mxu0 %v1825
  %2446 = vmatprep.subr.bf16.mxu0 0
  %2447 = vmatpush1.bf16.msra.mxu0 %v1832
  %2448 = vmatprep.subr.bf16.mxu0 0
  %2449 = vmatpush1.bf16.msra.mxu0 %v1839
  %2450 = vmatprep.subr.bf16.mxu0 0
  %2451 = vmatpush1.bf16.msra.mxu0 %v1846
  %2452 = vmatprep.subr.bf16.mxu0 0
  %2453 = vmatpush1.bf16.msra.mxu0 %v1853
  %2454 = vmatprep.subr.bf16.mxu0 0
  %2455 = vmatpush1.bf16.msra.mxu0 %v1860
  %2456 = vmatprep.subr.bf16.mxu0 0
  %2457 = vmatpush1.bf16.msra.mxu0 %v1867
  %2458 = vmatprep.subr.bf16.mxu0 0
  %2459 = vmatpush1.bf16.msra.mxu0 %v1874
  %2460 = vmatprep.subr.bf16.mxu0 0
  %2461 = vmatpush1.bf16.msra.mxu0 %v1881
  %2462 = vmatprep.subr.bf16.mxu0 0
  %2463 = vmatpush1.bf16.msra.mxu0 %v1888
  %2464 = vmatprep.subr.bf16.mxu0 0
  %2465 = vmatpush1.bf16.msra.mxu0 %v1895
  %2466 = vmatprep.subr.bf16.mxu0 0
  %2467 = vmatpush1.bf16.msra.mxu0 %v1902
  %2468 = vmatprep.subr.bf16.mxu0 0
  %2469 = vmatpush1.bf16.msra.mxu0 %v1909
  %2470 = vmatprep.subr.bf16.mxu0 0
  %2471 = vmatpush1.bf16.msra.mxu0 %v1916
  %2472 = vmatprep.mubr.bf16.mxu0 %v695
  %2473 = vmatmul.mubr.bf16.gmra.mrb[0].mxu0 %v694
  %v2474 = vpop.f32.mrb[0].mxu0
  %v2475 = vadd.f32 %v2434, %v2474
  %v2476 = vpop.f32.mrb[0].mxu0
  %v2477 = vpop.f32.mrb[0].mxu0
  %v2478 = vadd.f32 %v2437, %v2477
  %v2479 = vpop.f32.mrb[0].mxu0
  %2480 = vdwg.mxu0
  %v2481 = vtanh.pop %v2219
  %v2482 = vtanh.pop %v2221
  %v2483 = vtanh.pop %v2305
  %v2484 = vtanh.pop %v2307
  %v2485 = vtanh.pop %v2391
  %v2486 = vtanh.pop %v2393
  %v2487 = vtanh.pop %v2475
  %v2488 = vtanh.pop %v2223
  %v2489 = vtanh.pop %v2225
  %v2490 = vtanh.pop %v2309
  %v2491 = vtanh.pop %v2311
  %v2492 = vtanh.pop %v2395
  %v2493 = vtanh.pop %v2397
  %v2494 = vtanh.pop %v2478
  %2495 = vst [vmem:[%s7] sm:$0xff] %v2481
  %2496 = vst [vmem:[%s7 + $0x8] sm:$0xff] %v2482
  %2497 = vst [vmem:[%s7 + $0x10] sm:$0xff] %v2483
  %2498 = vst [vmem:[%s7 + $0x18] sm:$0xff] %v2484
  %2499 = vst [vmem:[%s7 + $0x20] sm:$0xff] %v2485
  %2500 = vst [vmem:[%s7 + $0x28] sm:$0xff] %v2486
  %vm2501 = vcmask 130048
  %2502 = vst.msk [vmem:[%s7 + $0x30] sm:$0xff] %vm2501, %v2487
  %2503 = vst [vmem:[%s7 + $0x38] sm:$0xff] %v2488
  %2504 = vst [vmem:[%s7 + $0x40] sm:$0xff] %v2489
  %2505 = vst [vmem:[%s7 + $0x48] sm:$0xff] %v2490
  %2506 = vst [vmem:[%s7 + $0x50] sm:$0xff] %v2491
  %2507 = vst [vmem:[%s7 + $0x58] sm:$0xff] %v2492
  %2508 = vst [vmem:[%s7 + $0x60] sm:$0xff] %v2493
  %2509 = vst.msk [vmem:[%s7 + $0x68] sm:$0xff] %vm2501, %v2494
  // Predicated region
  $region30: #{generator_forward.1} parent=0 // pred_check
    _
  $region31: #{generator_forward.1} parent=0 // pred_check_branch
    %2511 = sbr.rel (0) target = $region33
  $region32: #{generator_forward.1} parent=0 // pred_region
    _
  $region33: #{generator_forward.1} parent=0 // pred_fallthru
    _
  // Predicated region
  $region34: #{generator_forward.1} parent=0 // pred_check
    _
  $region35: #{generator_forward.1} parent=0 // pred_check_branch
    %2513 = sbr.rel (0) target = $region37
  $region36: #{generator_forward.1} parent=0 // pred_region
    _
  $region37: #{generator_forward.1} parent=0 // pred_fallthru
    _

</llo_original>
